<compile_context>
chip_gen: v6e
topology: v6e:2x2x1
jax: 0.10.0
libtpu: 0.0.40
codegen_flags: <defaults>
</compile_context>

<pallas_src>
import jax
import jax.numpy as jnp
from jax.experimental import pallas as pl
from jax.experimental.pallas import tpu as pltpu

FEAT = 2048          # per-backbone pooled feature dim
IN_DIM = 2 * FEAT    # 4096 = concat width
OUT = 120            # Linear(4096, 120)
OUT_PAD = 128        # lane-dense padded output width (keep at 128)


# ----------------------------------------------------------------------------
# Pallas kernel: out = x1 @ W_top + x2 @ W_bot + b   (concat fused, f32 acc)
#   x1, x2 : (TB, 2048) f32     W_top/W_bot : (2048, 128) bf16
#   b      : (1, 128)  f32      out         : (TB, 128) f32
# ----------------------------------------------------------------------------
def fused_head_kernel(x1_ref, x2_ref, w1_ref, w2_ref, b_ref, o_ref):
    w1 = w1_ref[...].astype(jnp.float32)   # bf16 -> f32 upcast rides the VPU
    w2 = w2_ref[...].astype(jnp.float32)
    acc = jnp.dot(x1_ref[...], w1, preferred_element_type=jnp.float32)
    acc = acc + jnp.dot(x2_ref[...], w2, preferred_element_type=jnp.float32)
    o_ref[...] = acc + b_ref[...]


def _round_up(x, m):
    return ((x + m - 1) // m) * m


def fused_output_head(x1, x2, w1_bf16, w2_bf16, b_pad):
    """x1, x2: (B, FEAT) f32; w*_bf16: (FEAT, 128) bf16; b_pad: (1, 128) f32."""
    B = x1.shape[0]
    # Sublane-aligned batch block; single step for small B, parallel grid for
    # large B so VMEM stays bounded and both v7x TensorCores get work.
    if B <= 256:
        tb = _round_up(max(B, 8), 8)
        b_padded = tb
    else:
        tb = 256
        b_padded = _round_up(B, tb)
    if b_padded != B:
        pad = ((0, b_padded - B), (0, 0))
        x1 = jnp.pad(x1, pad)
        x2 = jnp.pad(x2, pad)
    grid = (b_padded // tb,)

    cost = pl.CostEstimate(
        flops=2 * b_padded * IN_DIM * OUT_PAD,
        bytes_accessed=(2 * b_padded * FEAT * 4      # x1, x2 (f32)
                        + 2 * FEAT * OUT_PAD * 2     # weight halves (bf16)
                        + OUT_PAD * 4                # bias
                        + b_padded * OUT_PAD * 4),   # output
        transcendentals=0,
    )

    out_pad = pl.pallas_call(
        fused_head_kernel,
        out_shape=jax.ShapeDtypeStruct((b_padded, OUT_PAD), jnp.float32),
        grid_spec=pltpu.PrefetchScalarGridSpec(
            num_scalar_prefetch=0,
            grid=grid,
            in_specs=[
                pl.BlockSpec((tb, FEAT), lambda i: (i, 0)),
                pl.BlockSpec((tb, FEAT), lambda i: (i, 0)),
                pl.BlockSpec((FEAT, OUT_PAD), lambda i: (0, 0)),
                pl.BlockSpec((FEAT, OUT_PAD), lambda i: (0, 0)),
                pl.BlockSpec((1, OUT_PAD), lambda i: (0, 0)),
            ],
            out_specs=pl.BlockSpec((tb, OUT_PAD), lambda i: (i, 0)),
        ),
        compiler_params=pltpu.CompilerParams(
            dimension_semantics=("parallel",)),
        cost_estimate=cost,
    )(x1, x2, w1_bf16, w2_bf16, b_pad)
    return out_pad[:B, :OUT]


# ----------------------------------------------------------------------------
# One-time parameter preparation (hoisted out of the per-call path).
# ----------------------------------------------------------------------------
def prepare_head_params(fc_w, fc_b):
    """fc_w: (120, 4096) f32 (PyTorch Linear layout), fc_b: (120,) f32."""
    w_t = jnp.transpose(fc_w)                                   # (4096, 120)
    w_t_pad = jnp.zeros((IN_DIM, OUT_PAD), jnp.float32).at[:, :OUT].set(w_t)
    w_top = w_t_pad[:FEAT].astype(jnp.bfloat16)                 # (2048, 128)
    w_bot = w_t_pad[FEAT:].astype(jnp.bfloat16)                 # (2048, 128)
    b_pad = jnp.zeros((1, OUT_PAD), jnp.float32).at[:, :OUT].set(fc_b)
    return w_top, w_bot, b_pad


# ----------------------------------------------------------------------------
# Synthetic deterministic backbones.
# TODO(synk): the real Inception-v3 / ResNet-50 backbones are external modules
# passed into __init__ and are not reproduced here; they are modeled as
# global-average-pool + linear projection to 2048 features.
# ----------------------------------------------------------------------------
def backbone_features(x_nchw, proj):
    gap = jnp.mean(x_nchw, axis=(2, 3))          # (B, C)
    return gap @ proj                            # (B, FEAT)


@jax.jit
def model_forward(x_nchw, params):
    x1 = backbone_features(x_nchw, params["inception_proj"])
    x2 = backbone_features(x_nchw, params["resnet_proj"])
    # Dropout(0.7) -> identity at inference.
    return fused_output_head(x1, x2,
                             params["fc_w_top_bf16"],
                             params["fc_w_bot_bf16"],
                             params["fc_b_pad"])


# ----------------------------------------------------------------------------
# Main
# ----------------------------------------------------------------------------
if __name__ == "__main__":
    key = jax.random.PRNGKey(0)
    kx, k1, k2, kw, kb = jax.random.split(key, 5)

    B, C, H, W = 2, 4, 16, 16
    x = jax.random.normal(kx, (B, C, H, W), dtype=jnp.float32)

    fc_w = jax.random.normal(kw, (OUT, IN_DIM), dtype=jnp.float32) * 0.02
    fc_b = jax.random.normal(kb, (OUT,), dtype=jnp.float32) * 0.01
    w_top, w_bot, b_pad = prepare_head_params(fc_w, fc_b)   # hoisted, done once

    params = {
        "inception_proj": jax.random.normal(k1, (C, FEAT), dtype=jnp.float32) * 0.05,
        "resnet_proj":    jax.random.normal(k2, (C, FEAT), dtype=jnp.float32) * 0.05,
        "fc_w_top_bf16":  w_top,
        "fc_w_bot_bf16":  w_bot,
        "fc_b_pad":       b_pad,
    }

    out = jax.block_until_ready(model_forward(x, params))
    assert out.shape == (B, OUT), out.shape

    # Pure-JAX f32 reference for the head (concat + linear).
    x1_ref = backbone_features(x, params["inception_proj"])
    x2_ref = backbone_features(x, params["resnet_proj"])
    ref = jnp.concatenate([x1_ref, x2_ref], axis=1) @ fc_w.T + fc_b
    # Only the weight is bf16-quantized (activations stay f32) -> tight-ish tol.
    err = float(jnp.max(jnp.abs(out - ref)))
    assert jnp.allclose(out, ref, atol=1e-2, rtol=1e-2), err

    print("KERNEL_OK")
</pallas_src>

<mosaic_0001>
module attributes {stable_mosaic.version = 11 : i64} {
  func.func @fused_head_kernel(%arg0: i32, %arg1: memref<8x2048xf32, #tpu.memory_space<vmem>>, %arg2: memref<8x2048xf32, #tpu.memory_space<vmem>>, %arg3: memref<2048x128xbf16, #tpu.memory_space<vmem>>, %arg4: memref<2048x128xbf16, #tpu.memory_space<vmem>>, %arg5: memref<1x128xf32, #tpu.memory_space<vmem>>, %arg6: memref<8x128xf32, #tpu.memory_space<vmem>>) attributes {dimension_semantics = [#tpu.dimension_semantics<parallel>], iteration_bounds = array<i64: 1>, scalar_prefetch = 0 : i64, scratch_operands = 0 : i64, tpu.core_type = #tpu.core_type<tc>, window_params = [{transform_indices = @transform_0, window_bounds = array<i64: 8, 2048>}, {transform_indices = @transform_1, window_bounds = array<i64: 8, 2048>}, {pipeline_mode = #tpu.pipeline_mode<synchronous>, transform_indices = @transform_2, window_bounds = array<i64: 2048, 128>}, {pipeline_mode = #tpu.pipeline_mode<synchronous>, transform_indices = @transform_3, window_bounds = array<i64: 2048, 128>}, {pipeline_mode = #tpu.pipeline_mode<synchronous>, transform_indices = @transform_4, window_bounds = array<i64: 1, 128>}, {transform_indices = @transform_5, window_bounds = array<i64: 8, 128>}]} {
    %c0 = arith.constant 0 : index
    %c0_0 = arith.constant 0 : index
    %0 = vector.load %arg3[%c0, %c0_0] : memref<2048x128xbf16, #tpu.memory_space<vmem>>, vector<2048x128xbf16>
    %1 = arith.extf %0 : vector<2048x128xbf16> to vector<2048x128xf32>
    %c0_1 = arith.constant 0 : index
    %c0_2 = arith.constant 0 : index
    %2 = vector.load %arg4[%c0_1, %c0_2] : memref<2048x128xbf16, #tpu.memory_space<vmem>>, vector<2048x128xbf16>
    %3 = arith.extf %2 : vector<2048x128xbf16> to vector<2048x128xf32>
    %c0_3 = arith.constant 0 : index
    %c0_4 = arith.constant 0 : index
    %4 = vector.load %arg1[%c0_3, %c0_4] : memref<8x2048xf32, #tpu.memory_space<vmem>>, vector<8x2048xf32>
    %cst = arith.constant dense<0.000000e+00> : vector<8x128xf32>
    %5 = tpu.matmul %4, %1, %cst {dimension_numbers = #tpu.dot_dimension_numbers<[1], [0], [0], [1], [0, 0, 1, 1], [], []>} : vector<8x2048xf32>, vector<2048x128xf32>, vector<8x128xf32> -> vector<8x128xf32>
    %c0_5 = arith.constant 0 : index
    %c0_6 = arith.constant 0 : index
    %6 = vector.load %arg2[%c0_5, %c0_6] : memref<8x2048xf32, #tpu.memory_space<vmem>>, vector<8x2048xf32>
    %cst_7 = arith.constant dense<0.000000e+00> : vector<8x128xf32>
    %7 = tpu.matmul %6, %3, %cst_7 {dimension_numbers = #tpu.dot_dimension_numbers<[1], [0], [0], [1], [0, 0, 1, 1], [], []>} : vector<8x2048xf32>, vector<2048x128xf32>, vector<8x128xf32> -> vector<8x128xf32>
    %8 = arith.addf %5, %7 : vector<8x128xf32>
    %c0_8 = arith.constant 0 : index
    %c0_9 = arith.constant 0 : index
    %9 = vector.load %arg5[%c0_8, %c0_9] : memref<1x128xf32, #tpu.memory_space<vmem>>, vector<1x128xf32>
    %10 = vector.broadcast %9 : vector<1x128xf32> to vector<8x128xf32>
    %11 = arith.addf %8, %10 : vector<8x128xf32>
    %c0_10 = arith.constant 0 : index
    %c0_11 = arith.constant 0 : index
    %12 = vector.load %arg6[%c0_10, %c0_11] : memref<8x128xf32, #tpu.memory_space<vmem>>, vector<8x128xf32>
    tpu.vector_store %arg6[%c0_10, %c0_11], %11 {strides = array<i32>} : memref<8x128xf32, #tpu.memory_space<vmem>>, vector<8x128xf32>,
    return
  }
  func.func @transform_0(%arg0: i32) -> (i32, i32) {
    %c0_i32 = arith.constant 0 : i32
    %c0_i32_0 = arith.constant 0 : i32
    return %arg0, %c0_i32 : i32, i32
  }
  func.func @transform_1(%arg0: i32) -> (i32, i32) {
    %c0_i32 = arith.constant 0 : i32
    %c0_i32_0 = arith.constant 0 : i32
    return %arg0, %c0_i32 : i32, i32
  }
  func.func @transform_2(%arg0: i32) -> (i32, i32) {
    %c0_i32 = arith.constant 0 : i32
    %c0_i32_0 = arith.constant 0 : i32
    %c0_i32_1 = arith.constant 0 : i32
    return %c0_i32, %c0_i32_0 : i32, i32
  }
  func.func @transform_3(%arg0: i32) -> (i32, i32) {
    %c0_i32 = arith.constant 0 : i32
    %c0_i32_0 = arith.constant 0 : i32
    %c0_i32_1 = arith.constant 0 : i32
    return %c0_i32, %c0_i32_0 : i32, i32
  }
  func.func @transform_4(%arg0: i32) -> (i32, i32) {
    %c0_i32 = arith.constant 0 : i32
    %c0_i32_0 = arith.constant 0 : i32
    %c0_i32_1 = arith.constant 0 : i32
    return %c0_i32, %c0_i32_0 : i32, i32
  }
  func.func @transform_5(%arg0: i32) -> (i32, i32) {
    %c0_i32 = arith.constant 0 : i32
    %c0_i32_0 = arith.constant 0 : i32
    return %arg0, %c0_i32 : i32, i32
  }
}

</mosaic_0001>

<llo_original>
// kernel: model_forward.1
$region0: #{model_forward.1}
  #allocation0 [shape = 'u32[]', space=smem, size = 0x4, offset = 0x4, fixed_abs, tag = 'smem constant byte address 0x4 - core index']
  #allocation1 [shape = 'u32[144,128]{1,0:T(1,128)}', space=vmem, size = 0x12000, scoped, tag = 'internal scratch']
  %s0 = inlined_call_operand.vmem [shape: f32[8,2048], index: 0, kind: input, shape index: {}]
  %s1 = inlined_call_operand.vmem [shape: f32[8,2048], index: 1, kind: input, shape index: {}]
  %s2 = inlined_call_operand.hbm [shape: bf16[2048,128], index: 2, kind: input, shape index: {}]
  %s3 = inlined_call_operand.hbm [shape: bf16[2048,128], index: 3, kind: input, shape index: {}]
  %s4 = inlined_call_operand.vmem [shape: f32[1,128], index: 4, kind: input, shape index: {}]
  %s5 = inlined_call_operand.vmem [shape: f32[8,128], index: 5, kind: output, shape index: {}]
  %s6 = sld [smem:[#allocation0]]
  $region38: #{model_forward.1} parent=0
    _
  %s8 = ssub.s32 1, %s6
  %s9 = scalar_select 0, %s8, %s6
  $region1: #{model_forward.1} parent=0
    #allocation2 [shape = 'u8[524288]{0}', space=vmem, size = 0x80000, scoped, tag = 'input window, operand 2, single buffered']
    #allocation3 [shape = 's32[1]{0}', space=sflag, size = 0x4, scoped, tag = 'scoped memory for model_forward.1']
    #allocation4 [shape = 'u8[524288]{0}', space=vmem, size = 0x80000, scoped, tag = 'input window, operand 3, single buffered']
    #allocation5 [shape = 's32[1]{0}', space=sflag, size = 0x4, scoped, tag = 'scoped memory for model_forward.1']
    %10 = vsyncpa [#allocation3], 0
    %11 = vsyncpa [#allocation5], 0
    // Predicated region
    $region2: #{model_forward.1} parent=1 // pred_check
      _
    $region3: #{model_forward.1} parent=1 // pred_check_branch
      %13 = sbr.rel (0) target = $region5
    $region4: #{model_forward.1} parent=1 // pred_region
      _
    $region5: #{model_forward.1} parent=1 // pred_fallthru
      _
    // Predicated region
    $region6: #{model_forward.1} parent=1 // pred_check
      _
    $region7: #{model_forward.1} parent=1 // pred_check_branch
      %15 = sbr.rel (0) target = $region9
    $region8: #{model_forward.1} parent=1 // pred_region
      _
    $region9: #{model_forward.1} parent=1 // pred_fallthru
      _
    // Predicated region
    $region10: #{model_forward.1} parent=1 // pred_check
      _
    $region11: #{model_forward.1} parent=1 // pred_check_branch
      %17 = sbr.rel (0) target = $region13
    $region12: #{model_forward.1} parent=1 // pred_region
      %s19 = ssub.s32 16384, 16384
      %20 = vsyncadd [#allocation3], %s19
      %s21 = sshll.u32 [#allocation2], 4
      %s22 = int_to_ptr.vmem [resolvable:$true] %s21
      %27 = dma.hbm_to_vmem [thread:$0]  %s2, 16384, %s22, [#allocation3], 64, 64, 4
    $region13: #{model_forward.1} parent=1 // pred_fallthru
      _
    // Predicated region
    $region14: #{model_forward.1} parent=1 // pred_check
      _
    $region15: #{model_forward.1} parent=1 // pred_check_branch
      %29 = sbr.rel (0) target = $region17
    $region16: #{model_forward.1} parent=1 // pred_region
      %s31 = ssub.s32 16384, 16384
      %32 = vsyncadd [#allocation5], %s31
      %s33 = sshll.u32 [#allocation4], 4
      %s34 = int_to_ptr.vmem [resolvable:$true] %s33
      %39 = dma.hbm_to_vmem [thread:$0]  %s3, 16384, %s34, [#allocation5], 64, 64, 4
    $region17: #{model_forward.1} parent=1 // pred_fallthru
      _
    // Predicated region
    $region18: #{model_forward.1} parent=1 // pred_check
      _
    $region19: #{model_forward.1} parent=1 // pred_check_branch
      %41 = sbr.rel (0) target = $region21
    $region20: #{model_forward.1} parent=1 // pred_region
      _
    $region21: #{model_forward.1} parent=1 // pred_fallthru
      _
    // Predicated region
    $region22: #{model_forward.1} parent=1 // pred_check
      _
    $region23: #{model_forward.1} parent=1 // pred_check_branch
      %43 = sbr.rel (0) target = $region25
    $region24: #{model_forward.1} parent=1 // pred_region
      %44 = dma.done [#allocation3], 16384
    $region25: #{model_forward.1} parent=1 // pred_fallthru
      _
    // Predicated region
    $region26: #{model_forward.1} parent=1 // pred_check
      _
    $region27: #{model_forward.1} parent=1 // pred_check_branch
      %46 = sbr.rel (0) target = $region29
    $region28: #{model_forward.1} parent=1 // pred_region
      %47 = dma.done [#allocation5], 16384
    $region29: #{model_forward.1} parent=1 // pred_fallthru
      _
    %v48 = vld [vmem:[#allocation2] sm:$0xf]
    %v49 = vld [vmem:[#allocation2 + $0x4] sm:$0xf]
    %v50 = vld [vmem:[#allocation2 + $0x8] sm:$0xf]
    %v51 = vld [vmem:[#allocation2 + $0xc] sm:$0xf]
    %v52 = vld [vmem:[#allocation2 + $0x10] sm:$0xf]
    %v53 = vld [vmem:[#allocation2 + $0x14] sm:$0xf]
    %v54 = vld [vmem:[#allocation2 + $0x18] sm:$0xf]
    %v55 = vld [vmem:[#allocation2 + $0x1c] sm:$0xf]
    %v56 = vld [vmem:[#allocation2 + $0x20] sm:$0xf]
    %v57 = vld [vmem:[#allocation2 + $0x24] sm:$0xf]
    %v58 = vld [vmem:[#allocation2 + $0x28] sm:$0xf]
    %v59 = vld [vmem:[#allocation2 + $0x2c] sm:$0xf]
    %v60 = vld [vmem:[#allocation2 + $0x30] sm:$0xf]
    %v61 = vld [vmem:[#allocation2 + $0x34] sm:$0xf]
    %v62 = vld [vmem:[#allocation2 + $0x38] sm:$0xf]
    %v63 = vld [vmem:[#allocation2 + $0x3c] sm:$0xf]
    %v64 = vld [vmem:[#allocation2 + $0x40] sm:$0xf]
    %v65 = vld [vmem:[#allocation2 + $0x44] sm:$0xf]
    %v66 = vld [vmem:[#allocation2 + $0x48] sm:$0xf]
    %v67 = vld [vmem:[#allocation2 + $0x4c] sm:$0xf]
    %v68 = vld [vmem:[#allocation2 + $0x50] sm:$0xf]
    %v69 = vld [vmem:[#allocation2 + $0x54] sm:$0xf]
    %v70 = vld [vmem:[#allocation2 + $0x58] sm:$0xf]
    %v71 = vld [vmem:[#allocation2 + $0x5c] sm:$0xf]
    %v72 = vld [vmem:[#allocation2 + $0x60] sm:$0xf]
    %v73 = vld [vmem:[#allocation2 + $0x64] sm:$0xf]
    %v74 = vld [vmem:[#allocation2 + $0x68] sm:$0xf]
    %v75 = vld [vmem:[#allocation2 + $0x6c] sm:$0xf]
    %v76 = vld [vmem:[#allocation2 + $0x70] sm:$0xf]
    %v77 = vld [vmem:[#allocation2 + $0x74] sm:$0xf]
    %v78 = vld [vmem:[#allocation2 + $0x78] sm:$0xf]
    %v79 = vld [vmem:[#allocation2 + $0x7c] sm:$0xf]
    %v80 = vld [vmem:[#allocation2 + $0x80] sm:$0xf]
    %v81 = vld [vmem:[#allocation2 + $0x84] sm:$0xf]
    %v82 = vld [vmem:[#allocation2 + $0x88] sm:$0xf]
    %v83 = vld [vmem:[#allocation2 + $0x8c] sm:$0xf]
    %v84 = vld [vmem:[#allocation2 + $0x90] sm:$0xf]
    %v85 = vld [vmem:[#allocation2 + $0x94] sm:$0xf]
    %v86 = vld [vmem:[#allocation2 + $0x98] sm:$0xf]
    %v87 = vld [vmem:[#allocation2 + $0x9c] sm:$0xf]
    %v88 = vld [vmem:[#allocation2 + $0xa0] sm:$0xf]
    %v89 = vld [vmem:[#allocation2 + $0xa4] sm:$0xf]
    %v90 = vld [vmem:[#allocation2 + $0xa8] sm:$0xf]
    %v91 = vld [vmem:[#allocation2 + $0xac] sm:$0xf]
    %v92 = vld [vmem:[#allocation2 + $0xb0] sm:$0xf]
    %v93 = vld [vmem:[#allocation2 + $0xb4] sm:$0xf]
    %v94 = vld [vmem:[#allocation2 + $0xb8] sm:$0xf]
    %v95 = vld [vmem:[#allocation2 + $0xbc] sm:$0xf]
    %v96 = vld [vmem:[#allocation2 + $0xc0] sm:$0xf]
    %v97 = vld [vmem:[#allocation2 + $0xc4] sm:$0xf]
    %v98 = vld [vmem:[#allocation2 + $0xc8] sm:$0xf]
    %v99 = vld [vmem:[#allocation2 + $0xcc] sm:$0xf]
    %v100 = vld [vmem:[#allocation2 + $0xd0] sm:$0xf]
    %v101 = vld [vmem:[#allocation2 + $0xd4] sm:$0xf]
    %v102 = vld [vmem:[#allocation2 + $0xd8] sm:$0xf]
    %v103 = vld [vmem:[#allocation2 + $0xdc] sm:$0xf]
    %v104 = vld [vmem:[#allocation2 + $0xe0] sm:$0xf]
    %v105 = vld [vmem:[#allocation2 + $0xe4] sm:$0xf]
    %v106 = vld [vmem:[#allocation2 + $0xe8] sm:$0xf]
    %v107 = vld [vmem:[#allocation2 + $0xec] sm:$0xf]
    %v108 = vld [vmem:[#allocation2 + $0xf0] sm:$0xf]
    %v109 = vld [vmem:[#allocation2 + $0xf4] sm:$0xf]
    %v110 = vld [vmem:[#allocation2 + $0xf8] sm:$0xf]
    %v111 = vld [vmem:[#allocation2 + $0xfc] sm:$0xf]
    %v112 = vld [vmem:[#allocation2 + $0x100] sm:$0xf]
    %v113 = vld [vmem:[#allocation2 + $0x104] sm:$0xf]
    %v114 = vld [vmem:[#allocation2 + $0x108] sm:$0xf]
    %v115 = vld [vmem:[#allocation2 + $0x10c] sm:$0xf]
    %v116 = vld [vmem:[#allocation2 + $0x110] sm:$0xf]
    %v117 = vld [vmem:[#allocation2 + $0x114] sm:$0xf]
    %v118 = vld [vmem:[#allocation2 + $0x118] sm:$0xf]
    %v119 = vld [vmem:[#allocation2 + $0x11c] sm:$0xf]
    %v120 = vld [vmem:[#allocation2 + $0x120] sm:$0xf]
    %v121 = vld [vmem:[#allocation2 + $0x124] sm:$0xf]
    %v122 = vld [vmem:[#allocation2 + $0x128] sm:$0xf]
    %v123 = vld [vmem:[#allocation2 + $0x12c] sm:$0xf]
    %v124 = vld [vmem:[#allocation2 + $0x130] sm:$0xf]
    %v125 = vld [vmem:[#allocation2 + $0x134] sm:$0xf]
    %v126 = vld [vmem:[#allocation2 + $0x138] sm:$0xf]
    %v127 = vld [vmem:[#allocation2 + $0x13c] sm:$0xf]
    %v128 = vld [vmem:[#allocation2 + $0x140] sm:$0xf]
    %v129 = vld [vmem:[#allocation2 + $0x144] sm:$0xf]
    %v130 = vld [vmem:[#allocation2 + $0x148] sm:$0xf]
    %v131 = vld [vmem:[#allocation2 + $0x14c] sm:$0xf]
    %v132 = vld [vmem:[#allocation2 + $0x150] sm:$0xf]
    %v133 = vld [vmem:[#allocation2 + $0x154] sm:$0xf]
    %v134 = vld [vmem:[#allocation2 + $0x158] sm:$0xf]
    %v135 = vld [vmem:[#allocation2 + $0x15c] sm:$0xf]
    %v136 = vld [vmem:[#allocation2 + $0x160] sm:$0xf]
    %v137 = vld [vmem:[#allocation2 + $0x164] sm:$0xf]
    %v138 = vld [vmem:[#allocation2 + $0x168] sm:$0xf]
    %v139 = vld [vmem:[#allocation2 + $0x16c] sm:$0xf]
    %v140 = vld [vmem:[#allocation2 + $0x170] sm:$0xf]
    %v141 = vld [vmem:[#allocation2 + $0x174] sm:$0xf]
    %v142 = vld [vmem:[#allocation2 + $0x178] sm:$0xf]
    %v143 = vld [vmem:[#allocation2 + $0x17c] sm:$0xf]
    %v144 = vld [vmem:[#allocation2 + $0x180] sm:$0xf]
    %v145 = vld [vmem:[#allocation2 + $0x184] sm:$0xf]
    %v146 = vld [vmem:[#allocation2 + $0x188] sm:$0xf]
    %v147 = vld [vmem:[#allocation2 + $0x18c] sm:$0xf]
    %v148 = vld [vmem:[#allocation2 + $0x190] sm:$0xf]
    %v149 = vld [vmem:[#allocation2 + $0x194] sm:$0xf]
    %v150 = vld [vmem:[#allocation2 + $0x198] sm:$0xf]
    %v151 = vld [vmem:[#allocation2 + $0x19c] sm:$0xf]
    %v152 = vld [vmem:[#allocation2 + $0x1a0] sm:$0xf]
    %v153 = vld [vmem:[#allocation2 + $0x1a4] sm:$0xf]
    %v154 = vld [vmem:[#allocation2 + $0x1a8] sm:$0xf]
    %v155 = vld [vmem:[#allocation2 + $0x1ac] sm:$0xf]
    %v156 = vld [vmem:[#allocation2 + $0x1b0] sm:$0xf]
    %v157 = vld [vmem:[#allocation2 + $0x1b4] sm:$0xf]
    %v158 = vld [vmem:[#allocation2 + $0x1b8] sm:$0xf]
    %v159 = vld [vmem:[#allocation2 + $0x1bc] sm:$0xf]
    %v160 = vld [vmem:[#allocation2 + $0x1c0] sm:$0xf]
    %v161 = vld [vmem:[#allocation2 + $0x1c4] sm:$0xf]
    %v162 = vld [vmem:[#allocation2 + $0x1c8] sm:$0xf]
    %v163 = vld [vmem:[#allocation2 + $0x1cc] sm:$0xf]
    %v164 = vld [vmem:[#allocation2 + $0x1d0] sm:$0xf]
    %v165 = vld [vmem:[#allocation2 + $0x1d4] sm:$0xf]
    %v166 = vld [vmem:[#allocation2 + $0x1d8] sm:$0xf]
    %v167 = vld [vmem:[#allocation2 + $0x1dc] sm:$0xf]
    %v168 = vld [vmem:[#allocation2 + $0x1e0] sm:$0xf]
    %v169 = vld [vmem:[#allocation2 + $0x1e4] sm:$0xf]
    %v170 = vld [vmem:[#allocation2 + $0x1e8] sm:$0xf]
    %v171 = vld [vmem:[#allocation2 + $0x1ec] sm:$0xf]
    %v172 = vld [vmem:[#allocation2 + $0x1f0] sm:$0xf]
    %v173 = vld [vmem:[#allocation2 + $0x1f4] sm:$0xf]
    %v174 = vld [vmem:[#allocation2 + $0x1f8] sm:$0xf]
    %v175 = vld [vmem:[#allocation2 + $0x1fc] sm:$0xf]
    %v176 = vld [vmem:[#allocation2 + $0x200] sm:$0xf]
    %v177 = vld [vmem:[#allocation2 + $0x204] sm:$0xf]
    %v178 = vld [vmem:[#allocation2 + $0x208] sm:$0xf]
    %v179 = vld [vmem:[#allocation2 + $0x20c] sm:$0xf]
    %v180 = vld [vmem:[#allocation2 + $0x210] sm:$0xf]
    %v181 = vld [vmem:[#allocation2 + $0x214] sm:$0xf]
    %v182 = vld [vmem:[#allocation2 + $0x218] sm:$0xf]
    %v183 = vld [vmem:[#allocation2 + $0x21c] sm:$0xf]
    %v184 = vld [vmem:[#allocation2 + $0x220] sm:$0xf]
    %v185 = vld [vmem:[#allocation2 + $0x224] sm:$0xf]
    %v186 = vld [vmem:[#allocation2 + $0x228] sm:$0xf]
    %v187 = vld [vmem:[#allocation2 + $0x22c] sm:$0xf]
    %v188 = vld [vmem:[#allocation2 + $0x230] sm:$0xf]
    %v189 = vld [vmem:[#allocation2 + $0x234] sm:$0xf]
    %v190 = vld [vmem:[#allocation2 + $0x238] sm:$0xf]
    %v191 = vld [vmem:[#allocation2 + $0x23c] sm:$0xf]
    %v192 = vld [vmem:[#allocation2 + $0x240] sm:$0xf]
    %v193 = vld [vmem:[#allocation2 + $0x244] sm:$0xf]
    %v194 = vld [vmem:[#allocation2 + $0x248] sm:$0xf]
    %v195 = vld [vmem:[#allocation2 + $0x24c] sm:$0xf]
    %v196 = vld [vmem:[#allocation2 + $0x250] sm:$0xf]
    %v197 = vld [vmem:[#allocation2 + $0x254] sm:$0xf]
    %v198 = vld [vmem:[#allocation2 + $0x258] sm:$0xf]
    %v199 = vld [vmem:[#allocation2 + $0x25c] sm:$0xf]
    %v200 = vld [vmem:[#allocation2 + $0x260] sm:$0xf]
    %v201 = vld [vmem:[#allocation2 + $0x264] sm:$0xf]
    %v202 = vld [vmem:[#allocation2 + $0x268] sm:$0xf]
    %v203 = vld [vmem:[#allocation2 + $0x26c] sm:$0xf]
    %v204 = vld [vmem:[#allocation2 + $0x270] sm:$0xf]
    %v205 = vld [vmem:[#allocation2 + $0x274] sm:$0xf]
    %v206 = vld [vmem:[#allocation2 + $0x278] sm:$0xf]
    %v207 = vld [vmem:[#allocation2 + $0x27c] sm:$0xf]
    %v208 = vld [vmem:[#allocation2 + $0x280] sm:$0xf]
    %v209 = vld [vmem:[#allocation2 + $0x284] sm:$0xf]
    %v210 = vld [vmem:[#allocation2 + $0x288] sm:$0xf]
    %v211 = vld [vmem:[#allocation2 + $0x28c] sm:$0xf]
    %v212 = vld [vmem:[#allocation2 + $0x290] sm:$0xf]
    %v213 = vld [vmem:[#allocation2 + $0x294] sm:$0xf]
    %v214 = vld [vmem:[#allocation2 + $0x298] sm:$0xf]
    %v215 = vld [vmem:[#allocation2 + $0x29c] sm:$0xf]
    %v216 = vld [vmem:[#allocation2 + $0x2a0] sm:$0xf]
    %v217 = vld [vmem:[#allocation2 + $0x2a4] sm:$0xf]
    %v218 = vld [vmem:[#allocation2 + $0x2a8] sm:$0xf]
    %v219 = vld [vmem:[#allocation2 + $0x2ac] sm:$0xf]
    %v220 = vld [vmem:[#allocation2 + $0x2b0] sm:$0xf]
    %v221 = vld [vmem:[#allocation2 + $0x2b4] sm:$0xf]
    %v222 = vld [vmem:[#allocation2 + $0x2b8] sm:$0xf]
    %v223 = vld [vmem:[#allocation2 + $0x2bc] sm:$0xf]
    %v224 = vld [vmem:[#allocation2 + $0x2c0] sm:$0xf]
    %v225 = vld [vmem:[#allocation2 + $0x2c4] sm:$0xf]
    %v226 = vld [vmem:[#allocation2 + $0x2c8] sm:$0xf]
    %v227 = vld [vmem:[#allocation2 + $0x2cc] sm:$0xf]
    %v228 = vld [vmem:[#allocation2 + $0x2d0] sm:$0xf]
    %v229 = vld [vmem:[#allocation2 + $0x2d4] sm:$0xf]
    %v230 = vld [vmem:[#allocation2 + $0x2d8] sm:$0xf]
    %v231 = vld [vmem:[#allocation2 + $0x2dc] sm:$0xf]
    %v232 = vld [vmem:[#allocation2 + $0x2e0] sm:$0xf]
    %v233 = vld [vmem:[#allocation2 + $0x2e4] sm:$0xf]
    %v234 = vld [vmem:[#allocation2 + $0x2e8] sm:$0xf]
    %v235 = vld [vmem:[#allocation2 + $0x2ec] sm:$0xf]
    %v236 = vld [vmem:[#allocation2 + $0x2f0] sm:$0xf]
    %v237 = vld [vmem:[#allocation2 + $0x2f4] sm:$0xf]
    %v238 = vld [vmem:[#allocation2 + $0x2f8] sm:$0xf]
    %v239 = vld [vmem:[#allocation2 + $0x2fc] sm:$0xf]
    %v240 = vld [vmem:[#allocation2 + $0x300] sm:$0xf]
    %v241 = vld [vmem:[#allocation2 + $0x304] sm:$0xf]
    %v242 = vld [vmem:[#allocation2 + $0x308] sm:$0xf]
    %v243 = vld [vmem:[#allocation2 + $0x30c] sm:$0xf]
    %v244 = vld [vmem:[#allocation2 + $0x310] sm:$0xf]
    %v245 = vld [vmem:[#allocation2 + $0x314] sm:$0xf]
    %v246 = vld [vmem:[#allocation2 + $0x318] sm:$0xf]
    %v247 = vld [vmem:[#allocation2 + $0x31c] sm:$0xf]
    %v248 = vld [vmem:[#allocation2 + $0x320] sm:$0xf]
    %v249 = vld [vmem:[#allocation2 + $0x324] sm:$0xf]
    %v250 = vld [vmem:[#allocation2 + $0x328] sm:$0xf]
    %v251 = vld [vmem:[#allocation2 + $0x32c] sm:$0xf]
    %v252 = vld [vmem:[#allocation2 + $0x330] sm:$0xf]
    %v253 = vld [vmem:[#allocation2 + $0x334] sm:$0xf]
    %v254 = vld [vmem:[#allocation2 + $0x338] sm:$0xf]
    %v255 = vld [vmem:[#allocation2 + $0x33c] sm:$0xf]
    %v256 = vld [vmem:[#allocation2 + $0x340] sm:$0xf]
    %v257 = vld [vmem:[#allocation2 + $0x344] sm:$0xf]
    %v258 = vld [vmem:[#allocation2 + $0x348] sm:$0xf]
    %v259 = vld [vmem:[#allocation2 + $0x34c] sm:$0xf]
    %v260 = vld [vmem:[#allocation2 + $0x350] sm:$0xf]
    %v261 = vld [vmem:[#allocation2 + $0x354] sm:$0xf]
    %v262 = vld [vmem:[#allocation2 + $0x358] sm:$0xf]
    %v263 = vld [vmem:[#allocation2 + $0x35c] sm:$0xf]
    %v264 = vld [vmem:[#allocation2 + $0x360] sm:$0xf]
    %v265 = vld [vmem:[#allocation2 + $0x364] sm:$0xf]
    %v266 = vld [vmem:[#allocation2 + $0x368] sm:$0xf]
    %v267 = vld [vmem:[#allocation2 + $0x36c] sm:$0xf]
    %v268 = vld [vmem:[#allocation2 + $0x370] sm:$0xf]
    %v269 = vld [vmem:[#allocation2 + $0x374] sm:$0xf]
    %v270 = vld [vmem:[#allocation2 + $0x378] sm:$0xf]
    %v271 = vld [vmem:[#allocation2 + $0x37c] sm:$0xf]
    %v272 = vld [vmem:[#allocation2 + $0x380] sm:$0xf]
    %v273 = vld [vmem:[#allocation2 + $0x384] sm:$0xf]
    %v274 = vld [vmem:[#allocation2 + $0x388] sm:$0xf]
    %v275 = vld [vmem:[#allocation2 + $0x38c] sm:$0xf]
    %v276 = vld [vmem:[#allocation2 + $0x390] sm:$0xf]
    %v277 = vld [vmem:[#allocation2 + $0x394] sm:$0xf]
    %v278 = vld [vmem:[#allocation2 + $0x398] sm:$0xf]
    %v279 = vld [vmem:[#allocation2 + $0x39c] sm:$0xf]
    %v280 = vld [vmem:[#allocation2 + $0x3a0] sm:$0xf]
    %v281 = vld [vmem:[#allocation2 + $0x3a4] sm:$0xf]
    %v282 = vld [vmem:[#allocation2 + $0x3a8] sm:$0xf]
    %v283 = vld [vmem:[#allocation2 + $0x3ac] sm:$0xf]
    %v284 = vld [vmem:[#allocation2 + $0x3b0] sm:$0xf]
    %v285 = vld [vmem:[#allocation2 + $0x3b4] sm:$0xf]
    %v286 = vld [vmem:[#allocation2 + $0x3b8] sm:$0xf]
    %v287 = vld [vmem:[#allocation2 + $0x3bc] sm:$0xf]
    %v288 = vld [vmem:[#allocation2 + $0x3c0] sm:$0xf]
    %v289 = vld [vmem:[#allocation2 + $0x3c4] sm:$0xf]
    %v290 = vld [vmem:[#allocation2 + $0x3c8] sm:$0xf]
    %v291 = vld [vmem:[#allocation2 + $0x3cc] sm:$0xf]
    %v292 = vld [vmem:[#allocation2 + $0x3d0] sm:$0xf]
    %v293 = vld [vmem:[#allocation2 + $0x3d4] sm:$0xf]
    %v294 = vld [vmem:[#allocation2 + $0x3d8] sm:$0xf]
    %v295 = vld [vmem:[#allocation2 + $0x3dc] sm:$0xf]
    %v296 = vld [vmem:[#allocation2 + $0x3e0] sm:$0xf]
    %v297 = vld [vmem:[#allocation2 + $0x3e4] sm:$0xf]
    %v298 = vld [vmem:[#allocation2 + $0x3e8] sm:$0xf]
    %v299 = vld [vmem:[#allocation2 + $0x3ec] sm:$0xf]
    %v300 = vld [vmem:[#allocation2 + $0x3f0] sm:$0xf]
    %v301 = vld [vmem:[#allocation2 + $0x3f4] sm:$0xf]
    %v302 = vld [vmem:[#allocation2 + $0x3f8] sm:$0xf]
    %v303 = vld [vmem:[#allocation2 + $0x3fc] sm:$0xf]
    %v304 = vunpack.c.l.bf16 %v48
    %v305 = vunpack.c.l.bf16 %v49
    %v306 = vunpack.c.l.bf16 %v50
    %v307 = vunpack.c.l.bf16 %v51
    %v308 = vunpack.c.l.bf16 %v52
    %v309 = vunpack.c.l.bf16 %v53
    %v310 = vunpack.c.l.bf16 %v54
    %v311 = vunpack.c.l.bf16 %v55
    %v312 = vunpack.c.l.bf16 %v56
    %v313 = vunpack.c.l.bf16 %v57
    %v314 = vunpack.c.l.bf16 %v58
    %v315 = vunpack.c.l.bf16 %v59
    %v316 = vunpack.c.l.bf16 %v60
    %v317 = vunpack.c.l.bf16 %v61
    %v318 = vunpack.c.l.bf16 %v62
    %v319 = vunpack.c.l.bf16 %v63
    %v320 = vunpack.c.l.bf16 %v64
    %v321 = vunpack.c.l.bf16 %v65
    %v322 = vunpack.c.l.bf16 %v66
    %v323 = vunpack.c.l.bf16 %v67
    %v324 = vunpack.c.l.bf16 %v68
    %v325 = vunpack.c.l.bf16 %v69
    %v326 = vunpack.c.l.bf16 %v70
    %v327 = vunpack.c.l.bf16 %v71
    %v328 = vunpack.c.l.bf16 %v72
    %v329 = vunpack.c.l.bf16 %v73
    %v330 = vunpack.c.l.bf16 %v74
    %v331 = vunpack.c.l.bf16 %v75
    %v332 = vunpack.c.l.bf16 %v76
    %v333 = vunpack.c.l.bf16 %v77
    %v334 = vunpack.c.l.bf16 %v78
    %v335 = vunpack.c.l.bf16 %v79
    %v336 = vunpack.c.l.bf16 %v80
    %v337 = vunpack.c.l.bf16 %v81
    %v338 = vunpack.c.l.bf16 %v82
    %v339 = vunpack.c.l.bf16 %v83
    %v340 = vunpack.c.l.bf16 %v84
    %v341 = vunpack.c.l.bf16 %v85
    %v342 = vunpack.c.l.bf16 %v86
    %v343 = vunpack.c.l.bf16 %v87
    %v344 = vunpack.c.l.bf16 %v88
    %v345 = vunpack.c.l.bf16 %v89
    %v346 = vunpack.c.l.bf16 %v90
    %v347 = vunpack.c.l.bf16 %v91
    %v348 = vunpack.c.l.bf16 %v92
    %v349 = vunpack.c.l.bf16 %v93
    %v350 = vunpack.c.l.bf16 %v94
    %v351 = vunpack.c.l.bf16 %v95
    %v352 = vunpack.c.l.bf16 %v96
    %v353 = vunpack.c.l.bf16 %v97
    %v354 = vunpack.c.l.bf16 %v98
    %v355 = vunpack.c.l.bf16 %v99
    %v356 = vunpack.c.l.bf16 %v100
    %v357 = vunpack.c.l.bf16 %v101
    %v358 = vunpack.c.l.bf16 %v102
    %v359 = vunpack.c.l.bf16 %v103
    %v360 = vunpack.c.l.bf16 %v104
    %v361 = vunpack.c.l.bf16 %v105
    %v362 = vunpack.c.l.bf16 %v106
    %v363 = vunpack.c.l.bf16 %v107
    %v364 = vunpack.c.l.bf16 %v108
    %v365 = vunpack.c.l.bf16 %v109
    %v366 = vunpack.c.l.bf16 %v110
    %v367 = vunpack.c.l.bf16 %v111
    %v368 = vunpack.c.l.bf16 %v112
    %v369 = vunpack.c.l.bf16 %v113
    %v370 = vunpack.c.l.bf16 %v114
    %v371 = vunpack.c.l.bf16 %v115
    %v372 = vunpack.c.l.bf16 %v116
    %v373 = vunpack.c.l.bf16 %v117
    %v374 = vunpack.c.l.bf16 %v118
    %v375 = vunpack.c.l.bf16 %v119
    %v376 = vunpack.c.l.bf16 %v120
    %v377 = vunpack.c.l.bf16 %v121
    %v378 = vunpack.c.l.bf16 %v122
    %v379 = vunpack.c.l.bf16 %v123
    %v380 = vunpack.c.l.bf16 %v124
    %v381 = vunpack.c.l.bf16 %v125
    %v382 = vunpack.c.l.bf16 %v126
    %v383 = vunpack.c.l.bf16 %v127
    %v384 = vunpack.c.l.bf16 %v128
    %v385 = vunpack.c.l.bf16 %v129
    %v386 = vunpack.c.l.bf16 %v130
    %v387 = vunpack.c.l.bf16 %v131
    %v388 = vunpack.c.l.bf16 %v132
    %v389 = vunpack.c.l.bf16 %v133
    %v390 = vunpack.c.l.bf16 %v134
    %v391 = vunpack.c.l.bf16 %v135
    %v392 = vunpack.c.l.bf16 %v136
    %v393 = vunpack.c.l.bf16 %v137
    %v394 = vunpack.c.l.bf16 %v138
    %v395 = vunpack.c.l.bf16 %v139
    %v396 = vunpack.c.l.bf16 %v140
    %v397 = vunpack.c.l.bf16 %v141
    %v398 = vunpack.c.l.bf16 %v142
    %v399 = vunpack.c.l.bf16 %v143
    %v400 = vunpack.c.l.bf16 %v144
    %v401 = vunpack.c.l.bf16 %v145
    %v402 = vunpack.c.l.bf16 %v146
    %v403 = vunpack.c.l.bf16 %v147
    %v404 = vunpack.c.l.bf16 %v148
    %v405 = vunpack.c.l.bf16 %v149
    %v406 = vunpack.c.l.bf16 %v150
    %v407 = vunpack.c.l.bf16 %v151
    %v408 = vunpack.c.l.bf16 %v152
    %v409 = vunpack.c.l.bf16 %v153
    %v410 = vunpack.c.l.bf16 %v154
    %v411 = vunpack.c.l.bf16 %v155
    %v412 = vunpack.c.l.bf16 %v156
    %v413 = vunpack.c.l.bf16 %v157
    %v414 = vunpack.c.l.bf16 %v158
    %v415 = vunpack.c.l.bf16 %v159
    %v416 = vunpack.c.l.bf16 %v160
    %v417 = vunpack.c.l.bf16 %v161
    %v418 = vunpack.c.l.bf16 %v162
    %v419 = vunpack.c.l.bf16 %v163
    %v420 = vunpack.c.l.bf16 %v164
    %v421 = vunpack.c.l.bf16 %v165
    %v422 = vunpack.c.l.bf16 %v166
    %v423 = vunpack.c.l.bf16 %v167
    %v424 = vunpack.c.l.bf16 %v168
    %v425 = vunpack.c.l.bf16 %v169
    %v426 = vunpack.c.l.bf16 %v170
    %v427 = vunpack.c.l.bf16 %v171
    %v428 = vunpack.c.l.bf16 %v172
    %v429 = vunpack.c.l.bf16 %v173
    %v430 = vunpack.c.l.bf16 %v174
    %v431 = vunpack.c.l.bf16 %v175
    %v432 = vunpack.c.l.bf16 %v176
    %v433 = vunpack.c.l.bf16 %v177
    %v434 = vunpack.c.l.bf16 %v178
    %v435 = vunpack.c.l.bf16 %v179
    %v436 = vunpack.c.l.bf16 %v180
    %v437 = vunpack.c.l.bf16 %v181
    %v438 = vunpack.c.l.bf16 %v182
    %v439 = vunpack.c.l.bf16 %v183
    %v440 = vunpack.c.l.bf16 %v184
    %v441 = vunpack.c.l.bf16 %v185
    %v442 = vunpack.c.l.bf16 %v186
    %v443 = vunpack.c.l.bf16 %v187
    %v444 = vunpack.c.l.bf16 %v188
    %v445 = vunpack.c.l.bf16 %v189
    %v446 = vunpack.c.l.bf16 %v190
    %v447 = vunpack.c.l.bf16 %v191
    %v448 = vunpack.c.l.bf16 %v192
    %v449 = vunpack.c.l.bf16 %v193
    %v450 = vunpack.c.l.bf16 %v194
    %v451 = vunpack.c.l.bf16 %v195
    %v452 = vunpack.c.l.bf16 %v196
    %v453 = vunpack.c.l.bf16 %v197
    %v454 = vunpack.c.l.bf16 %v198
    %v455 = vunpack.c.l.bf16 %v199
    %v456 = vunpack.c.l.bf16 %v200
    %v457 = vunpack.c.l.bf16 %v201
    %v458 = vunpack.c.l.bf16 %v202
    %v459 = vunpack.c.l.bf16 %v203
    %v460 = vunpack.c.l.bf16 %v204
    %v461 = vunpack.c.l.bf16 %v205
    %v462 = vunpack.c.l.bf16 %v206
    %v463 = vunpack.c.l.bf16 %v207
    %v464 = vunpack.c.l.bf16 %v208
    %v465 = vunpack.c.l.bf16 %v209
    %v466 = vunpack.c.l.bf16 %v210
    %v467 = vunpack.c.l.bf16 %v211
    %v468 = vunpack.c.l.bf16 %v212
    %v469 = vunpack.c.l.bf16 %v213
    %v470 = vunpack.c.l.bf16 %v214
    %v471 = vunpack.c.l.bf16 %v215
    %v472 = vunpack.c.l.bf16 %v216
    %v473 = vunpack.c.l.bf16 %v217
    %v474 = vunpack.c.l.bf16 %v218
    %v475 = vunpack.c.l.bf16 %v219
    %v476 = vunpack.c.l.bf16 %v220
    %v477 = vunpack.c.l.bf16 %v221
    %v478 = vunpack.c.l.bf16 %v222
    %v479 = vunpack.c.l.bf16 %v223
    %v480 = vunpack.c.l.bf16 %v224
    %v481 = vunpack.c.l.bf16 %v225
    %v482 = vunpack.c.l.bf16 %v226
    %v483 = vunpack.c.l.bf16 %v227
    %v484 = vunpack.c.l.bf16 %v228
    %v485 = vunpack.c.l.bf16 %v229
    %v486 = vunpack.c.l.bf16 %v230
    %v487 = vunpack.c.l.bf16 %v231
    %v488 = vunpack.c.l.bf16 %v232
    %v489 = vunpack.c.l.bf16 %v233
    %v490 = vunpack.c.l.bf16 %v234
    %v491 = vunpack.c.l.bf16 %v235
    %v492 = vunpack.c.l.bf16 %v236
    %v493 = vunpack.c.l.bf16 %v237
    %v494 = vunpack.c.l.bf16 %v238
    %v495 = vunpack.c.l.bf16 %v239
    %v496 = vunpack.c.l.bf16 %v240
    %v497 = vunpack.c.l.bf16 %v241
    %v498 = vunpack.c.l.bf16 %v242
    %v499 = vunpack.c.l.bf16 %v243
    %v500 = vunpack.c.l.bf16 %v244
    %v501 = vunpack.c.l.bf16 %v245
    %v502 = vunpack.c.l.bf16 %v246
    %v503 = vunpack.c.l.bf16 %v247
    %v504 = vunpack.c.l.bf16 %v248
    %v505 = vunpack.c.l.bf16 %v249
    %v506 = vunpack.c.l.bf16 %v250
    %v507 = vunpack.c.l.bf16 %v251
    %v508 = vunpack.c.l.bf16 %v252
    %v509 = vunpack.c.l.bf16 %v253
    %v510 = vunpack.c.l.bf16 %v254
    %v511 = vunpack.c.l.bf16 %v255
    %v512 = vunpack.c.l.bf16 %v256
    %v513 = vunpack.c.l.bf16 %v257
    %v514 = vunpack.c.l.bf16 %v258
    %v515 = vunpack.c.l.bf16 %v259
    %v516 = vunpack.c.l.bf16 %v260
    %v517 = vunpack.c.l.bf16 %v261
    %v518 = vunpack.c.l.bf16 %v262
    %v519 = vunpack.c.l.bf16 %v263
    %v520 = vunpack.c.l.bf16 %v264
    %v521 = vunpack.c.l.bf16 %v265
    %v522 = vunpack.c.l.bf16 %v266
    %v523 = vunpack.c.l.bf16 %v267
    %v524 = vunpack.c.l.bf16 %v268
    %v525 = vunpack.c.l.bf16 %v269
    %v526 = vunpack.c.l.bf16 %v270
    %v527 = vunpack.c.l.bf16 %v271
    %v528 = vunpack.c.l.bf16 %v272
    %v529 = vunpack.c.l.bf16 %v273
    %v530 = vunpack.c.l.bf16 %v274
    %v531 = vunpack.c.l.bf16 %v275
    %v532 = vunpack.c.l.bf16 %v276
    %v533 = vunpack.c.l.bf16 %v277
    %v534 = vunpack.c.l.bf16 %v278
    %v535 = vunpack.c.l.bf16 %v279
    %v536 = vunpack.c.l.bf16 %v280
    %v537 = vunpack.c.l.bf16 %v281
    %v538 = vunpack.c.l.bf16 %v282
    %v539 = vunpack.c.l.bf16 %v283
    %v540 = vunpack.c.l.bf16 %v284
    %v541 = vunpack.c.l.bf16 %v285
    %v542 = vunpack.c.l.bf16 %v286
    %v543 = vunpack.c.l.bf16 %v287
    %v544 = vunpack.c.l.bf16 %v288
    %v545 = vunpack.c.l.bf16 %v289
    %v546 = vunpack.c.l.bf16 %v290
    %v547 = vunpack.c.l.bf16 %v291
    %v548 = vunpack.c.l.bf16 %v292
    %v549 = vunpack.c.l.bf16 %v293
    %v550 = vunpack.c.l.bf16 %v294
    %v551 = vunpack.c.l.bf16 %v295
    %v552 = vunpack.c.l.bf16 %v296
    %v553 = vunpack.c.l.bf16 %v297
    %v554 = vunpack.c.l.bf16 %v298
    %v555 = vunpack.c.l.bf16 %v299
    %v556 = vunpack.c.l.bf16 %v300
    %v557 = vunpack.c.l.bf16 %v301
    %v558 = vunpack.c.l.bf16 %v302
    %v559 = vunpack.c.l.bf16 %v303
    %v560 = vld [vmem:[#allocation4] sm:$0xf]
    %v561 = vld [vmem:[#allocation4 + $0x4] sm:$0xf]
    %v562 = vld [vmem:[#allocation4 + $0x8] sm:$0xf]
    %v563 = vld [vmem:[#allocation4 + $0xc] sm:$0xf]
    %v564 = vld [vmem:[#allocation4 + $0x10] sm:$0xf]
    %v565 = vld [vmem:[#allocation4 + $0x14] sm:$0xf]
    %v566 = vld [vmem:[#allocation4 + $0x18] sm:$0xf]
    %v567 = vld [vmem:[#allocation4 + $0x1c] sm:$0xf]
    %v568 = vld [vmem:[#allocation4 + $0x20] sm:$0xf]
    %v569 = vld [vmem:[#allocation4 + $0x24] sm:$0xf]
    %v570 = vld [vmem:[#allocation4 + $0x28] sm:$0xf]
    %v571 = vld [vmem:[#allocation4 + $0x2c] sm:$0xf]
    %v572 = vld [vmem:[#allocation4 + $0x30] sm:$0xf]
    %v573 = vld [vmem:[#allocation4 + $0x34] sm:$0xf]
    %v574 = vld [vmem:[#allocation4 + $0x38] sm:$0xf]
    %v575 = vld [vmem:[#allocation4 + $0x3c] sm:$0xf]
    %v576 = vld [vmem:[#allocation4 + $0x40] sm:$0xf]
    %v577 = vld [vmem:[#allocation4 + $0x44] sm:$0xf]
    %v578 = vld [vmem:[#allocation4 + $0x48] sm:$0xf]
    %v579 = vld [vmem:[#allocation4 + $0x4c] sm:$0xf]
    %v580 = vld [vmem:[#allocation4 + $0x50] sm:$0xf]
    %v581 = vld [vmem:[#allocation4 + $0x54] sm:$0xf]
    %v582 = vld [vmem:[#allocation4 + $0x58] sm:$0xf]
    %v583 = vld [vmem:[#allocation4 + $0x5c] sm:$0xf]
    %v584 = vld [vmem:[#allocation4 + $0x60] sm:$0xf]
    %v585 = vld [vmem:[#allocation4 + $0x64] sm:$0xf]
    %v586 = vld [vmem:[#allocation4 + $0x68] sm:$0xf]
    %v587 = vld [vmem:[#allocation4 + $0x6c] sm:$0xf]
    %v588 = vld [vmem:[#allocation4 + $0x70] sm:$0xf]
    %v589 = vld [vmem:[#allocation4 + $0x74] sm:$0xf]
    %v590 = vld [vmem:[#allocation4 + $0x78] sm:$0xf]
    %v591 = vld [vmem:[#allocation4 + $0x7c] sm:$0xf]
    %v592 = vld [vmem:[#allocation4 + $0x80] sm:$0xf]
    %v593 = vld [vmem:[#allocation4 + $0x84] sm:$0xf]
    %v594 = vld [vmem:[#allocation4 + $0x88] sm:$0xf]
    %v595 = vld [vmem:[#allocation4 + $0x8c] sm:$0xf]
    %v596 = vld [vmem:[#allocation4 + $0x90] sm:$0xf]
    %v597 = vld [vmem:[#allocation4 + $0x94] sm:$0xf]
    %v598 = vld [vmem:[#allocation4 + $0x98] sm:$0xf]
    %v599 = vld [vmem:[#allocation4 + $0x9c] sm:$0xf]
    %v600 = vld [vmem:[#allocation4 + $0xa0] sm:$0xf]
    %v601 = vld [vmem:[#allocation4 + $0xa4] sm:$0xf]
    %v602 = vld [vmem:[#allocation4 + $0xa8] sm:$0xf]
    %v603 = vld [vmem:[#allocation4 + $0xac] sm:$0xf]
    %v604 = vld [vmem:[#allocation4 + $0xb0] sm:$0xf]
    %v605 = vld [vmem:[#allocation4 + $0xb4] sm:$0xf]
    %v606 = vld [vmem:[#allocation4 + $0xb8] sm:$0xf]
    %v607 = vld [vmem:[#allocation4 + $0xbc] sm:$0xf]
    %v608 = vld [vmem:[#allocation4 + $0xc0] sm:$0xf]
    %v609 = vld [vmem:[#allocation4 + $0xc4] sm:$0xf]
    %v610 = vld [vmem:[#allocation4 + $0xc8] sm:$0xf]
    %v611 = vld [vmem:[#allocation4 + $0xcc] sm:$0xf]
    %v612 = vld [vmem:[#allocation4 + $0xd0] sm:$0xf]
    %v613 = vld [vmem:[#allocation4 + $0xd4] sm:$0xf]
    %v614 = vld [vmem:[#allocation4 + $0xd8] sm:$0xf]
    %v615 = vld [vmem:[#allocation4 + $0xdc] sm:$0xf]
    %v616 = vld [vmem:[#allocation4 + $0xe0] sm:$0xf]
    %v617 = vld [vmem:[#allocation4 + $0xe4] sm:$0xf]
    %v618 = vld [vmem:[#allocation4 + $0xe8] sm:$0xf]
    %v619 = vld [vmem:[#allocation4 + $0xec] sm:$0xf]
    %v620 = vld [vmem:[#allocation4 + $0xf0] sm:$0xf]
    %v621 = vld [vmem:[#allocation4 + $0xf4] sm:$0xf]
    %v622 = vld [vmem:[#allocation4 + $0xf8] sm:$0xf]
    %v623 = vld [vmem:[#allocation4 + $0xfc] sm:$0xf]
    %v624 = vld [vmem:[#allocation4 + $0x100] sm:$0xf]
    %v625 = vld [vmem:[#allocation4 + $0x104] sm:$0xf]
    %v626 = vld [vmem:[#allocation4 + $0x108] sm:$0xf]
    %v627 = vld [vmem:[#allocation4 + $0x10c] sm:$0xf]
    %v628 = vld [vmem:[#allocation4 + $0x110] sm:$0xf]
    %v629 = vld [vmem:[#allocation4 + $0x114] sm:$0xf]
    %v630 = vld [vmem:[#allocation4 + $0x118] sm:$0xf]
    %v631 = vld [vmem:[#allocation4 + $0x11c] sm:$0xf]
    %v632 = vld [vmem:[#allocation4 + $0x120] sm:$0xf]
    %v633 = vld [vmem:[#allocation4 + $0x124] sm:$0xf]
    %v634 = vld [vmem:[#allocation4 + $0x128] sm:$0xf]
    %v635 = vld [vmem:[#allocation4 + $0x12c] sm:$0xf]
    %v636 = vld [vmem:[#allocation4 + $0x130] sm:$0xf]
    %v637 = vld [vmem:[#allocation4 + $0x134] sm:$0xf]
    %v638 = vld [vmem:[#allocation4 + $0x138] sm:$0xf]
    %v639 = vld [vmem:[#allocation4 + $0x13c] sm:$0xf]
    %v640 = vld [vmem:[#allocation4 + $0x140] sm:$0xf]
    %v641 = vld [vmem:[#allocation4 + $0x144] sm:$0xf]
    %v642 = vld [vmem:[#allocation4 + $0x148] sm:$0xf]
    %v643 = vld [vmem:[#allocation4 + $0x14c] sm:$0xf]
    %v644 = vld [vmem:[#allocation4 + $0x150] sm:$0xf]
    %v645 = vld [vmem:[#allocation4 + $0x154] sm:$0xf]
    %v646 = vld [vmem:[#allocation4 + $0x158] sm:$0xf]
    %v647 = vld [vmem:[#allocation4 + $0x15c] sm:$0xf]
    %v648 = vld [vmem:[#allocation4 + $0x160] sm:$0xf]
    %v649 = vld [vmem:[#allocation4 + $0x164] sm:$0xf]
    %v650 = vld [vmem:[#allocation4 + $0x168] sm:$0xf]
    %v651 = vld [vmem:[#allocation4 + $0x16c] sm:$0xf]
    %v652 = vld [vmem:[#allocation4 + $0x170] sm:$0xf]
    %v653 = vld [vmem:[#allocation4 + $0x174] sm:$0xf]
    %v654 = vld [vmem:[#allocation4 + $0x178] sm:$0xf]
    %v655 = vld [vmem:[#allocation4 + $0x17c] sm:$0xf]
    %v656 = vld [vmem:[#allocation4 + $0x180] sm:$0xf]
    %v657 = vld [vmem:[#allocation4 + $0x184] sm:$0xf]
    %v658 = vld [vmem:[#allocation4 + $0x188] sm:$0xf]
    %v659 = vld [vmem:[#allocation4 + $0x18c] sm:$0xf]
    %v660 = vld [vmem:[#allocation4 + $0x190] sm:$0xf]
    %v661 = vld [vmem:[#allocation4 + $0x194] sm:$0xf]
    %v662 = vld [vmem:[#allocation4 + $0x198] sm:$0xf]
    %v663 = vld [vmem:[#allocation4 + $0x19c] sm:$0xf]
    %v664 = vld [vmem:[#allocation4 + $0x1a0] sm:$0xf]
    %v665 = vld [vmem:[#allocation4 + $0x1a4] sm:$0xf]
    %v666 = vld [vmem:[#allocation4 + $0x1a8] sm:$0xf]
    %v667 = vld [vmem:[#allocation4 + $0x1ac] sm:$0xf]
    %v668 = vld [vmem:[#allocation4 + $0x1b0] sm:$0xf]
    %v669 = vld [vmem:[#allocation4 + $0x1b4] sm:$0xf]
    %v670 = vld [vmem:[#allocation4 + $0x1b8] sm:$0xf]
    %v671 = vld [vmem:[#allocation4 + $0x1bc] sm:$0xf]
    %v672 = vld [vmem:[#allocation4 + $0x1c0] sm:$0xf]
    %v673 = vld [vmem:[#allocation4 + $0x1c4] sm:$0xf]
    %v674 = vld [vmem:[#allocation4 + $0x1c8] sm:$0xf]
    %v675 = vld [vmem:[#allocation4 + $0x1cc] sm:$0xf]
    %v676 = vld [vmem:[#allocation4 + $0x1d0] sm:$0xf]
    %v677 = vld [vmem:[#allocation4 + $0x1d4] sm:$0xf]
    %v678 = vld [vmem:[#allocation4 + $0x1d8] sm:$0xf]
    %v679 = vld [vmem:[#allocation4 + $0x1dc] sm:$0xf]
    %v680 = vld [vmem:[#allocation4 + $0x1e0] sm:$0xf]
    %v681 = vld [vmem:[#allocation4 + $0x1e4] sm:$0xf]
    %v682 = vld [vmem:[#allocation4 + $0x1e8] sm:$0xf]
    %v683 = vld [vmem:[#allocation4 + $0x1ec] sm:$0xf]
    %v684 = vld [vmem:[#allocation4 + $0x1f0] sm:$0xf]
    %v685 = vld [vmem:[#allocation4 + $0x1f4] sm:$0xf]
    %v686 = vld [vmem:[#allocation4 + $0x1f8] sm:$0xf]
    %v687 = vld [vmem:[#allocation4 + $0x1fc] sm:$0xf]
    %v688 = vld [vmem:[#allocation4 + $0x200] sm:$0xf]
    %v689 = vld [vmem:[#allocation4 + $0x204] sm:$0xf]
    %v690 = vld [vmem:[#allocation4 + $0x208] sm:$0xf]
    %v691 = vld [vmem:[#allocation4 + $0x20c] sm:$0xf]
    %v692 = vld [vmem:[#allocation4 + $0x210] sm:$0xf]
    %v693 = vld [vmem:[#allocation4 + $0x214] sm:$0xf]
    %v694 = vld [vmem:[#allocation4 + $0x218] sm:$0xf]
    %v695 = vld [vmem:[#allocation4 + $0x21c] sm:$0xf]
    %v696 = vld [vmem:[#allocation4 + $0x220] sm:$0xf]
    %v697 = vld [vmem:[#allocation4 + $0x224] sm:$0xf]
    %v698 = vld [vmem:[#allocation4 + $0x228] sm:$0xf]
    %v699 = vld [vmem:[#allocation4 + $0x22c] sm:$0xf]
    %v700 = vld [vmem:[#allocation4 + $0x230] sm:$0xf]
    %v701 = vld [vmem:[#allocation4 + $0x234] sm:$0xf]
    %v702 = vld [vmem:[#allocation4 + $0x238] sm:$0xf]
    %v703 = vld [vmem:[#allocation4 + $0x23c] sm:$0xf]
    %v704 = vld [vmem:[#allocation4 + $0x240] sm:$0xf]
    %v705 = vld [vmem:[#allocation4 + $0x244] sm:$0xf]
    %v706 = vld [vmem:[#allocation4 + $0x248] sm:$0xf]
    %v707 = vld [vmem:[#allocation4 + $0x24c] sm:$0xf]
    %v708 = vld [vmem:[#allocation4 + $0x250] sm:$0xf]
    %v709 = vld [vmem:[#allocation4 + $0x254] sm:$0xf]
    %v710 = vld [vmem:[#allocation4 + $0x258] sm:$0xf]
    %v711 = vld [vmem:[#allocation4 + $0x25c] sm:$0xf]
    %v712 = vld [vmem:[#allocation4 + $0x260] sm:$0xf]
    %v713 = vld [vmem:[#allocation4 + $0x264] sm:$0xf]
    %v714 = vld [vmem:[#allocation4 + $0x268] sm:$0xf]
    %v715 = vld [vmem:[#allocation4 + $0x26c] sm:$0xf]
    %v716 = vld [vmem:[#allocation4 + $0x270] sm:$0xf]
    %v717 = vld [vmem:[#allocation4 + $0x274] sm:$0xf]
    %v718 = vld [vmem:[#allocation4 + $0x278] sm:$0xf]
    %v719 = vld [vmem:[#allocation4 + $0x27c] sm:$0xf]
    %v720 = vld [vmem:[#allocation4 + $0x280] sm:$0xf]
    %v721 = vld [vmem:[#allocation4 + $0x284] sm:$0xf]
    %v722 = vld [vmem:[#allocation4 + $0x288] sm:$0xf]
    %v723 = vld [vmem:[#allocation4 + $0x28c] sm:$0xf]
    %v724 = vld [vmem:[#allocation4 + $0x290] sm:$0xf]
    %v725 = vld [vmem:[#allocation4 + $0x294] sm:$0xf]
    %v726 = vld [vmem:[#allocation4 + $0x298] sm:$0xf]
    %v727 = vld [vmem:[#allocation4 + $0x29c] sm:$0xf]
    %v728 = vld [vmem:[#allocation4 + $0x2a0] sm:$0xf]
    %v729 = vld [vmem:[#allocation4 + $0x2a4] sm:$0xf]
    %v730 = vld [vmem:[#allocation4 + $0x2a8] sm:$0xf]
    %v731 = vld [vmem:[#allocation4 + $0x2ac] sm:$0xf]
    %v732 = vld [vmem:[#allocation4 + $0x2b0] sm:$0xf]
    %v733 = vld [vmem:[#allocation4 + $0x2b4] sm:$0xf]
    %v734 = vld [vmem:[#allocation4 + $0x2b8] sm:$0xf]
    %v735 = vld [vmem:[#allocation4 + $0x2bc] sm:$0xf]
    %v736 = vld [vmem:[#allocation4 + $0x2c0] sm:$0xf]
    %v737 = vld [vmem:[#allocation4 + $0x2c4] sm:$0xf]
    %v738 = vld [vmem:[#allocation4 + $0x2c8] sm:$0xf]
    %v739 = vld [vmem:[#allocation4 + $0x2cc] sm:$0xf]
    %v740 = vld [vmem:[#allocation4 + $0x2d0] sm:$0xf]
    %v741 = vld [vmem:[#allocation4 + $0x2d4] sm:$0xf]
    %v742 = vld [vmem:[#allocation4 + $0x2d8] sm:$0xf]
    %v743 = vld [vmem:[#allocation4 + $0x2dc] sm:$0xf]
    %v744 = vld [vmem:[#allocation4 + $0x2e0] sm:$0xf]
    %v745 = vld [vmem:[#allocation4 + $0x2e4] sm:$0xf]
    %v746 = vld [vmem:[#allocation4 + $0x2e8] sm:$0xf]
    %v747 = vld [vmem:[#allocation4 + $0x2ec] sm:$0xf]
    %v748 = vld [vmem:[#allocation4 + $0x2f0] sm:$0xf]
    %v749 = vld [vmem:[#allocation4 + $0x2f4] sm:$0xf]
    %v750 = vld [vmem:[#allocation4 + $0x2f8] sm:$0xf]
    %v751 = vld [vmem:[#allocation4 + $0x2fc] sm:$0xf]
    %v752 = vld [vmem:[#allocation4 + $0x300] sm:$0xf]
    %v753 = vld [vmem:[#allocation4 + $0x304] sm:$0xf]
    %v754 = vld [vmem:[#allocation4 + $0x308] sm:$0xf]
    %v755 = vld [vmem:[#allocation4 + $0x30c] sm:$0xf]
    %v756 = vld [vmem:[#allocation4 + $0x310] sm:$0xf]
    %v757 = vld [vmem:[#allocation4 + $0x314] sm:$0xf]
    %v758 = vld [vmem:[#allocation4 + $0x318] sm:$0xf]
    %v759 = vld [vmem:[#allocation4 + $0x31c] sm:$0xf]
    %v760 = vld [vmem:[#allocation4 + $0x320] sm:$0xf]
    %v761 = vld [vmem:[#allocation4 + $0x324] sm:$0xf]
    %v762 = vld [vmem:[#allocation4 + $0x328] sm:$0xf]
    %v763 = vld [vmem:[#allocation4 + $0x32c] sm:$0xf]
    %v764 = vld [vmem:[#allocation4 + $0x330] sm:$0xf]
    %v765 = vld [vmem:[#allocation4 + $0x334] sm:$0xf]
    %v766 = vld [vmem:[#allocation4 + $0x338] sm:$0xf]
    %v767 = vld [vmem:[#allocation4 + $0x33c] sm:$0xf]
    %v768 = vld [vmem:[#allocation4 + $0x340] sm:$0xf]
    %v769 = vld [vmem:[#allocation4 + $0x344] sm:$0xf]
    %v770 = vld [vmem:[#allocation4 + $0x348] sm:$0xf]
    %v771 = vld [vmem:[#allocation4 + $0x34c] sm:$0xf]
    %v772 = vld [vmem:[#allocation4 + $0x350] sm:$0xf]
    %v773 = vld [vmem:[#allocation4 + $0x354] sm:$0xf]
    %v774 = vld [vmem:[#allocation4 + $0x358] sm:$0xf]
    %v775 = vld [vmem:[#allocation4 + $0x35c] sm:$0xf]
    %v776 = vld [vmem:[#allocation4 + $0x360] sm:$0xf]
    %v777 = vld [vmem:[#allocation4 + $0x364] sm:$0xf]
    %v778 = vld [vmem:[#allocation4 + $0x368] sm:$0xf]
    %v779 = vld [vmem:[#allocation4 + $0x36c] sm:$0xf]
    %v780 = vld [vmem:[#allocation4 + $0x370] sm:$0xf]
    %v781 = vld [vmem:[#allocation4 + $0x374] sm:$0xf]
    %v782 = vld [vmem:[#allocation4 + $0x378] sm:$0xf]
    %v783 = vld [vmem:[#allocation4 + $0x37c] sm:$0xf]
    %v784 = vld [vmem:[#allocation4 + $0x380] sm:$0xf]
    %v785 = vld [vmem:[#allocation4 + $0x384] sm:$0xf]
    %v786 = vld [vmem:[#allocation4 + $0x388] sm:$0xf]
    %v787 = vld [vmem:[#allocation4 + $0x38c] sm:$0xf]
    %v788 = vld [vmem:[#allocation4 + $0x390] sm:$0xf]
    %v789 = vld [vmem:[#allocation4 + $0x394] sm:$0xf]
    %v790 = vld [vmem:[#allocation4 + $0x398] sm:$0xf]
    %v791 = vld [vmem:[#allocation4 + $0x39c] sm:$0xf]
    %v792 = vld [vmem:[#allocation4 + $0x3a0] sm:$0xf]
    %v793 = vld [vmem:[#allocation4 + $0x3a4] sm:$0xf]
    %v794 = vld [vmem:[#allocation4 + $0x3a8] sm:$0xf]
    %v795 = vld [vmem:[#allocation4 + $0x3ac] sm:$0xf]
    %v796 = vld [vmem:[#allocation4 + $0x3b0] sm:$0xf]
    %v797 = vld [vmem:[#allocation4 + $0x3b4] sm:$0xf]
    %v798 = vld [vmem:[#allocation4 + $0x3b8] sm:$0xf]
    %v799 = vld [vmem:[#allocation4 + $0x3bc] sm:$0xf]
    %v800 = vld [vmem:[#allocation4 + $0x3c0] sm:$0xf]
    %v801 = vld [vmem:[#allocation4 + $0x3c4] sm:$0xf]
    %v802 = vld [vmem:[#allocation4 + $0x3c8] sm:$0xf]
    %v803 = vld [vmem:[#allocation4 + $0x3cc] sm:$0xf]
    %v804 = vld [vmem:[#allocation4 + $0x3d0] sm:$0xf]
    %v805 = vld [vmem:[#allocation4 + $0x3d4] sm:$0xf]
    %v806 = vld [vmem:[#allocation4 + $0x3d8] sm:$0xf]
    %v807 = vld [vmem:[#allocation4 + $0x3dc] sm:$0xf]
    %v808 = vld [vmem:[#allocation4 + $0x3e0] sm:$0xf]
    %v809 = vld [vmem:[#allocation4 + $0x3e4] sm:$0xf]
    %v810 = vld [vmem:[#allocation4 + $0x3e8] sm:$0xf]
    %v811 = vld [vmem:[#allocation4 + $0x3ec] sm:$0xf]
    %v812 = vld [vmem:[#allocation4 + $0x3f0] sm:$0xf]
    %v813 = vld [vmem:[#allocation4 + $0x3f4] sm:$0xf]
    %v814 = vld [vmem:[#allocation4 + $0x3f8] sm:$0xf]
    %v815 = vld [vmem:[#allocation4 + $0x3fc] sm:$0xf]
    %v816 = vunpack.c.l.bf16 %v560
    %v817 = vunpack.c.l.bf16 %v561
    %v818 = vunpack.c.l.bf16 %v562
    %v819 = vunpack.c.l.bf16 %v563
    %v820 = vunpack.c.l.bf16 %v564
    %v821 = vunpack.c.l.bf16 %v565
    %v822 = vunpack.c.l.bf16 %v566
    %v823 = vunpack.c.l.bf16 %v567
    %v824 = vunpack.c.l.bf16 %v568
    %v825 = vunpack.c.l.bf16 %v569
    %v826 = vunpack.c.l.bf16 %v570
    %v827 = vunpack.c.l.bf16 %v571
    %v828 = vunpack.c.l.bf16 %v572
    %v829 = vunpack.c.l.bf16 %v573
    %v830 = vunpack.c.l.bf16 %v574
    %v831 = vunpack.c.l.bf16 %v575
    %v832 = vunpack.c.l.bf16 %v576
    %v833 = vunpack.c.l.bf16 %v577
    %v834 = vunpack.c.l.bf16 %v578
    %v835 = vunpack.c.l.bf16 %v579
    %v836 = vunpack.c.l.bf16 %v580
    %v837 = vunpack.c.l.bf16 %v581
    %v838 = vunpack.c.l.bf16 %v582
    %v839 = vunpack.c.l.bf16 %v583
    %v840 = vunpack.c.l.bf16 %v584
    %v841 = vunpack.c.l.bf16 %v585
    %v842 = vunpack.c.l.bf16 %v586
    %v843 = vunpack.c.l.bf16 %v587
    %v844 = vunpack.c.l.bf16 %v588
    %v845 = vunpack.c.l.bf16 %v589
    %v846 = vunpack.c.l.bf16 %v590
    %v847 = vunpack.c.l.bf16 %v591
    %v848 = vunpack.c.l.bf16 %v592
    %v849 = vunpack.c.l.bf16 %v593
    %v850 = vunpack.c.l.bf16 %v594
    %v851 = vunpack.c.l.bf16 %v595
    %v852 = vunpack.c.l.bf16 %v596
    %v853 = vunpack.c.l.bf16 %v597
    %v854 = vunpack.c.l.bf16 %v598
    %v855 = vunpack.c.l.bf16 %v599
    %v856 = vunpack.c.l.bf16 %v600
    %v857 = vunpack.c.l.bf16 %v601
    %v858 = vunpack.c.l.bf16 %v602
    %v859 = vunpack.c.l.bf16 %v603
    %v860 = vunpack.c.l.bf16 %v604
    %v861 = vunpack.c.l.bf16 %v605
    %v862 = vunpack.c.l.bf16 %v606
    %v863 = vunpack.c.l.bf16 %v607
    %v864 = vunpack.c.l.bf16 %v608
    %v865 = vunpack.c.l.bf16 %v609
    %v866 = vunpack.c.l.bf16 %v610
    %v867 = vunpack.c.l.bf16 %v611
    %v868 = vunpack.c.l.bf16 %v612
    %v869 = vunpack.c.l.bf16 %v613
    %v870 = vunpack.c.l.bf16 %v614
    %v871 = vunpack.c.l.bf16 %v615
    %v872 = vunpack.c.l.bf16 %v616
    %v873 = vunpack.c.l.bf16 %v617
    %v874 = vunpack.c.l.bf16 %v618
    %v875 = vunpack.c.l.bf16 %v619
    %v876 = vunpack.c.l.bf16 %v620
    %v877 = vunpack.c.l.bf16 %v621
    %v878 = vunpack.c.l.bf16 %v622
    %v879 = vunpack.c.l.bf16 %v623
    %v880 = vunpack.c.l.bf16 %v624
    %v881 = vunpack.c.l.bf16 %v625
    %v882 = vunpack.c.l.bf16 %v626
    %v883 = vunpack.c.l.bf16 %v627
    %v884 = vunpack.c.l.bf16 %v628
    %v885 = vunpack.c.l.bf16 %v629
    %v886 = vunpack.c.l.bf16 %v630
    %v887 = vunpack.c.l.bf16 %v631
    %v888 = vunpack.c.l.bf16 %v632
    %v889 = vunpack.c.l.bf16 %v633
    %v890 = vunpack.c.l.bf16 %v634
    %v891 = vunpack.c.l.bf16 %v635
    %v892 = vunpack.c.l.bf16 %v636
    %v893 = vunpack.c.l.bf16 %v637
    %v894 = vunpack.c.l.bf16 %v638
    %v895 = vunpack.c.l.bf16 %v639
    %v896 = vunpack.c.l.bf16 %v640
    %v897 = vunpack.c.l.bf16 %v641
    %v898 = vunpack.c.l.bf16 %v642
    %v899 = vunpack.c.l.bf16 %v643
    %v900 = vunpack.c.l.bf16 %v644
    %v901 = vunpack.c.l.bf16 %v645
    %v902 = vunpack.c.l.bf16 %v646
    %v903 = vunpack.c.l.bf16 %v647
    %v904 = vunpack.c.l.bf16 %v648
    %v905 = vunpack.c.l.bf16 %v649
    %v906 = vunpack.c.l.bf16 %v650
    %v907 = vunpack.c.l.bf16 %v651
    %v908 = vunpack.c.l.bf16 %v652
    %v909 = vunpack.c.l.bf16 %v653
    %v910 = vunpack.c.l.bf16 %v654
    %v911 = vunpack.c.l.bf16 %v655
    %v912 = vunpack.c.l.bf16 %v656
    %v913 = vunpack.c.l.bf16 %v657
    %v914 = vunpack.c.l.bf16 %v658
    %v915 = vunpack.c.l.bf16 %v659
    %v916 = vunpack.c.l.bf16 %v660
    %v917 = vunpack.c.l.bf16 %v661
    %v918 = vunpack.c.l.bf16 %v662
    %v919 = vunpack.c.l.bf16 %v663
    %v920 = vunpack.c.l.bf16 %v664
    %v921 = vunpack.c.l.bf16 %v665
    %v922 = vunpack.c.l.bf16 %v666
    %v923 = vunpack.c.l.bf16 %v667
    %v924 = vunpack.c.l.bf16 %v668
    %v925 = vunpack.c.l.bf16 %v669
    %v926 = vunpack.c.l.bf16 %v670
    %v927 = vunpack.c.l.bf16 %v671
    %v928 = vunpack.c.l.bf16 %v672
    %v929 = vunpack.c.l.bf16 %v673
    %v930 = vunpack.c.l.bf16 %v674
    %v931 = vunpack.c.l.bf16 %v675
    %v932 = vunpack.c.l.bf16 %v676
    %v933 = vunpack.c.l.bf16 %v677
    %v934 = vunpack.c.l.bf16 %v678
    %v935 = vunpack.c.l.bf16 %v679
    %v936 = vunpack.c.l.bf16 %v680
    %v937 = vunpack.c.l.bf16 %v681
    %v938 = vunpack.c.l.bf16 %v682
    %v939 = vunpack.c.l.bf16 %v683
    %v940 = vunpack.c.l.bf16 %v684
    %v941 = vunpack.c.l.bf16 %v685
    %v942 = vunpack.c.l.bf16 %v686
    %v943 = vunpack.c.l.bf16 %v687
    %v944 = vunpack.c.l.bf16 %v688
    %v945 = vunpack.c.l.bf16 %v689
    %v946 = vunpack.c.l.bf16 %v690
    %v947 = vunpack.c.l.bf16 %v691
    %v948 = vunpack.c.l.bf16 %v692
    %v949 = vunpack.c.l.bf16 %v693
    %v950 = vunpack.c.l.bf16 %v694
    %v951 = vunpack.c.l.bf16 %v695
    %v952 = vunpack.c.l.bf16 %v696
    %v953 = vunpack.c.l.bf16 %v697
    %v954 = vunpack.c.l.bf16 %v698
    %v955 = vunpack.c.l.bf16 %v699
    %v956 = vunpack.c.l.bf16 %v700
    %v957 = vunpack.c.l.bf16 %v701
    %v958 = vunpack.c.l.bf16 %v702
    %v959 = vunpack.c.l.bf16 %v703
    %v960 = vunpack.c.l.bf16 %v704
    %v961 = vunpack.c.l.bf16 %v705
    %v962 = vunpack.c.l.bf16 %v706
    %v963 = vunpack.c.l.bf16 %v707
    %v964 = vunpack.c.l.bf16 %v708
    %v965 = vunpack.c.l.bf16 %v709
    %v966 = vunpack.c.l.bf16 %v710
    %v967 = vunpack.c.l.bf16 %v711
    %v968 = vunpack.c.l.bf16 %v712
    %v969 = vunpack.c.l.bf16 %v713
    %v970 = vunpack.c.l.bf16 %v714
    %v971 = vunpack.c.l.bf16 %v715
    %v972 = vunpack.c.l.bf16 %v716
    %v973 = vunpack.c.l.bf16 %v717
    %v974 = vunpack.c.l.bf16 %v718
    %v975 = vunpack.c.l.bf16 %v719
    %v976 = vunpack.c.l.bf16 %v720
    %v977 = vunpack.c.l.bf16 %v721
    %v978 = vunpack.c.l.bf16 %v722
    %v979 = vunpack.c.l.bf16 %v723
    %v980 = vunpack.c.l.bf16 %v724
    %v981 = vunpack.c.l.bf16 %v725
    %v982 = vunpack.c.l.bf16 %v726
    %v983 = vunpack.c.l.bf16 %v727
    %v984 = vunpack.c.l.bf16 %v728
    %v985 = vunpack.c.l.bf16 %v729
    %v986 = vunpack.c.l.bf16 %v730
    %v987 = vunpack.c.l.bf16 %v731
    %v988 = vunpack.c.l.bf16 %v732
    %v989 = vunpack.c.l.bf16 %v733
    %v990 = vunpack.c.l.bf16 %v734
    %v991 = vunpack.c.l.bf16 %v735
    %v992 = vunpack.c.l.bf16 %v736
    %v993 = vunpack.c.l.bf16 %v737
    %v994 = vunpack.c.l.bf16 %v738
    %v995 = vunpack.c.l.bf16 %v739
    %v996 = vunpack.c.l.bf16 %v740
    %v997 = vunpack.c.l.bf16 %v741
    %v998 = vunpack.c.l.bf16 %v742
    %v999 = vunpack.c.l.bf16 %v743
    %v1000 = vunpack.c.l.bf16 %v744
    %v1001 = vunpack.c.l.bf16 %v745
    %v1002 = vunpack.c.l.bf16 %v746
    %v1003 = vunpack.c.l.bf16 %v747
    %v1004 = vunpack.c.l.bf16 %v748
    %v1005 = vunpack.c.l.bf16 %v749
    %v1006 = vunpack.c.l.bf16 %v750
    %v1007 = vunpack.c.l.bf16 %v751
    %v1008 = vunpack.c.l.bf16 %v752
    %v1009 = vunpack.c.l.bf16 %v753
    %v1010 = vunpack.c.l.bf16 %v754
    %v1011 = vunpack.c.l.bf16 %v755
    %v1012 = vunpack.c.l.bf16 %v756
    %v1013 = vunpack.c.l.bf16 %v757
    %v1014 = vunpack.c.l.bf16 %v758
    %v1015 = vunpack.c.l.bf16 %v759
    %v1016 = vunpack.c.l.bf16 %v760
    %v1017 = vunpack.c.l.bf16 %v761
    %v1018 = vunpack.c.l.bf16 %v762
    %v1019 = vunpack.c.l.bf16 %v763
    %v1020 = vunpack.c.l.bf16 %v764
    %v1021 = vunpack.c.l.bf16 %v765
    %v1022 = vunpack.c.l.bf16 %v766
    %v1023 = vunpack.c.l.bf16 %v767
    %v1024 = vunpack.c.l.bf16 %v768
    %v1025 = vunpack.c.l.bf16 %v769
    %v1026 = vunpack.c.l.bf16 %v770
    %v1027 = vunpack.c.l.bf16 %v771
    %v1028 = vunpack.c.l.bf16 %v772
    %v1029 = vunpack.c.l.bf16 %v773
    %v1030 = vunpack.c.l.bf16 %v774
    %v1031 = vunpack.c.l.bf16 %v775
    %v1032 = vunpack.c.l.bf16 %v776
    %v1033 = vunpack.c.l.bf16 %v777
    %v1034 = vunpack.c.l.bf16 %v778
    %v1035 = vunpack.c.l.bf16 %v779
    %v1036 = vunpack.c.l.bf16 %v780
    %v1037 = vunpack.c.l.bf16 %v781
    %v1038 = vunpack.c.l.bf16 %v782
    %v1039 = vunpack.c.l.bf16 %v783
    %v1040 = vunpack.c.l.bf16 %v784
    %v1041 = vunpack.c.l.bf16 %v785
    %v1042 = vunpack.c.l.bf16 %v786
    %v1043 = vunpack.c.l.bf16 %v787
    %v1044 = vunpack.c.l.bf16 %v788
    %v1045 = vunpack.c.l.bf16 %v789
    %v1046 = vunpack.c.l.bf16 %v790
    %v1047 = vunpack.c.l.bf16 %v791
    %v1048 = vunpack.c.l.bf16 %v792
    %v1049 = vunpack.c.l.bf16 %v793
    %v1050 = vunpack.c.l.bf16 %v794
    %v1051 = vunpack.c.l.bf16 %v795
    %v1052 = vunpack.c.l.bf16 %v796
    %v1053 = vunpack.c.l.bf16 %v797
    %v1054 = vunpack.c.l.bf16 %v798
    %v1055 = vunpack.c.l.bf16 %v799
    %v1056 = vunpack.c.l.bf16 %v800
    %v1057 = vunpack.c.l.bf16 %v801
    %v1058 = vunpack.c.l.bf16 %v802
    %v1059 = vunpack.c.l.bf16 %v803
    %v1060 = vunpack.c.l.bf16 %v804
    %v1061 = vunpack.c.l.bf16 %v805
    %v1062 = vunpack.c.l.bf16 %v806
    %v1063 = vunpack.c.l.bf16 %v807
    %v1064 = vunpack.c.l.bf16 %v808
    %v1065 = vunpack.c.l.bf16 %v809
    %v1066 = vunpack.c.l.bf16 %v810
    %v1067 = vunpack.c.l.bf16 %v811
    %v1068 = vunpack.c.l.bf16 %v812
    %v1069 = vunpack.c.l.bf16 %v813
    %v1070 = vunpack.c.l.bf16 %v814
    %v1071 = vunpack.c.l.bf16 %v815
    %v1072 = vld [vmem:[%s0] sm:$0xff]
    %v1073 = vld [vmem:[%s0 + $0x8] sm:$0xff]
    %v1074 = vld [vmem:[%s0 + $0x10] sm:$0xff]
    %v1075 = vld [vmem:[%s0 + $0x18] sm:$0xff]
    %v1076 = vld [vmem:[%s0 + $0x20] sm:$0xff]
    %v1077 = vld [vmem:[%s0 + $0x28] sm:$0xff]
    %v1078 = vld [vmem:[%s0 + $0x30] sm:$0xff]
    %v1079 = vld [vmem:[%s0 + $0x38] sm:$0xff]
    %v1080 = vld [vmem:[%s0 + $0x40] sm:$0xff]
    %v1081 = vld [vmem:[%s0 + $0x48] sm:$0xff]
    %v1082 = vld [vmem:[%s0 + $0x50] sm:$0xff]
    %v1083 = vld [vmem:[%s0 + $0x58] sm:$0xff]
    %v1084 = vld [vmem:[%s0 + $0x60] sm:$0xff]
    %v1085 = vld [vmem:[%s0 + $0x68] sm:$0xff]
    %v1086 = vld [vmem:[%s0 + $0x70] sm:$0xff]
    %v1087 = vld [vmem:[%s0 + $0x78] sm:$0xff]
    %v1088 = vld [vmem:[%s1] sm:$0xff]
    %v1089 = vld [vmem:[%s1 + $0x8] sm:$0xff]
    %v1090 = vld [vmem:[%s1 + $0x10] sm:$0xff]
    %v1091 = vld [vmem:[%s1 + $0x18] sm:$0xff]
    %v1092 = vld [vmem:[%s1 + $0x20] sm:$0xff]
    %v1093 = vld [vmem:[%s1 + $0x28] sm:$0xff]
    %v1094 = vld [vmem:[%s1 + $0x30] sm:$0xff]
    %v1095 = vld [vmem:[%s1 + $0x38] sm:$0xff]
    %v1096 = vld [vmem:[%s1 + $0x40] sm:$0xff]
    %v1097 = vld [vmem:[%s1 + $0x48] sm:$0xff]
    %v1098 = vld [vmem:[%s1 + $0x50] sm:$0xff]
    %v1099 = vld [vmem:[%s1 + $0x58] sm:$0xff]
    %v1100 = vld [vmem:[%s1 + $0x60] sm:$0xff]
    %v1101 = vld [vmem:[%s1 + $0x68] sm:$0xff]
    %v1102 = vld [vmem:[%s1 + $0x70] sm:$0xff]
    %v1103 = vld [vmem:[%s1 + $0x78] sm:$0xff]
    %1104 = vmatprep.subr.mxu0 0.0
    %1105 = vmatpush1.msra.mxu0 %v831
    %1106 = vmatprep.subr.mxu0 0.0
    %1107 = vmatpush1.msra.mxu0 %v830
    %1108 = vmatprep.subr.mxu0 0.0
    %1109 = vmatpush1.msra.mxu0 %v829
    %1110 = vmatprep.subr.mxu0 0.0
    %1111 = vmatpush1.msra.mxu0 %v828
    %1112 = vmatprep.subr.mxu0 0.0
    %1113 = vmatpush1.msra.mxu0 %v827
    %1114 = vmatprep.subr.mxu0 0.0
    %1115 = vmatpush1.msra.mxu0 %v826
    %1116 = vmatprep.subr.mxu0 0.0
    %1117 = vmatpush1.msra.mxu0 %v825
    %1118 = vmatprep.subr.mxu0 0.0
    %1119 = vmatpush1.msra.mxu0 %v824
    %1120 = vmatprep.subr.mxu0 0.0
    %1121 = vmatpush1.msra.mxu0 %v823
    %1122 = vmatprep.subr.mxu0 0.0
    %1123 = vmatpush1.msra.mxu0 %v822
    %1124 = vmatprep.subr.mxu0 0.0
    %1125 = vmatpush1.msra.mxu0 %v821
    %1126 = vmatprep.subr.mxu0 0.0
    %1127 = vmatpush1.msra.mxu0 %v820
    %1128 = vmatprep.subr.mxu0 0.0
    %1129 = vmatpush1.msra.mxu0 %v819
    %1130 = vmatprep.subr.mxu0 0.0
    %1131 = vmatpush1.msra.mxu0 %v818
    %1132 = vmatprep.subr.mxu0 0.0
    %1133 = vmatpush1.msra.mxu0 %v817
    %1134 = vmatprep.subr.mxu0 0.0
    %1135 = vmatpush1.msra.mxu0 %v816
    %1136 = vmatprep.subr.mxu0 0.0
    %1137 = vmatpush2.msra.mxu0 %v847
    %1138 = vmatprep.subr.mxu0 0.0
    %1139 = vmatpush2.msra.mxu0 %v846
    %1140 = vmatprep.subr.mxu0 0.0
    %1141 = vmatpush2.msra.mxu0 %v845
    %1142 = vmatprep.subr.mxu0 0.0
    %1143 = vmatpush2.msra.mxu0 %v844
    %1144 = vmatprep.subr.mxu0 0.0
    %1145 = vmatpush2.msra.mxu0 %v843
    %1146 = vmatprep.subr.mxu0 0.0
    %1147 = vmatpush2.msra.mxu0 %v842
    %1148 = vmatprep.subr.mxu0 0.0
    %1149 = vmatpush2.msra.mxu0 %v841
    %1150 = vmatprep.subr.mxu0 0.0
    %1151 = vmatpush2.msra.mxu0 %v840
    %1152 = vmatprep.subr.mxu0 0.0
    %1153 = vmatpush2.msra.mxu0 %v839
    %1154 = vmatprep.subr.mxu0 0.0
    %1155 = vmatpush2.msra.mxu0 %v838
    %1156 = vmatprep.subr.mxu0 0.0
    %1157 = vmatpush2.msra.mxu0 %v837
    %1158 = vmatprep.subr.mxu0 0.0
    %1159 = vmatpush2.msra.mxu0 %v836
    %1160 = vmatprep.subr.mxu0 0.0
    %1161 = vmatpush2.msra.mxu0 %v835
    %1162 = vmatprep.subr.mxu0 0.0
    %1163 = vmatpush2.msra.mxu0 %v834
    %1164 = vmatprep.subr.mxu0 0.0
    %1165 = vmatpush2.msra.mxu0 %v833
    %1166 = vmatprep.subr.mxu0 0.0
    %1167 = vmatpush2.msra.mxu0 %v832
    %1168 = vmatprep.mubr.f32.mxu0 %v1089
    %1169 = vmatmul.mubr.f32.gmra.mxu0 %v1088
    %v1170 = vpop.f32.mrf.mxu0
    %v1171 = vadd.f32 0.0, %v1170
    %v1172 = vpop.f32.mrf.mxu0
    %1173 = vdwg.mxu0
    %1174 = vmatprep.subr.mxu0 0.0
    %1175 = vmatpush1.msra.mxu0 %v863
    %1176 = vmatprep.subr.mxu0 0.0
    %1177 = vmatpush1.msra.mxu0 %v862
    %1178 = vmatprep.subr.mxu0 0.0
    %1179 = vmatpush1.msra.mxu0 %v861
    %1180 = vmatprep.subr.mxu0 0.0
    %1181 = vmatpush1.msra.mxu0 %v860
    %1182 = vmatprep.subr.mxu0 0.0
    %1183 = vmatpush1.msra.mxu0 %v859
    %1184 = vmatprep.subr.mxu0 0.0
    %1185 = vmatpush1.msra.mxu0 %v858
    %1186 = vmatprep.subr.mxu0 0.0
    %1187 = vmatpush1.msra.mxu0 %v857
    %1188 = vmatprep.subr.mxu0 0.0
    %1189 = vmatpush1.msra.mxu0 %v856
    %1190 = vmatprep.subr.mxu0 0.0
    %1191 = vmatpush1.msra.mxu0 %v855
    %1192 = vmatprep.subr.mxu0 0.0
    %1193 = vmatpush1.msra.mxu0 %v854
    %1194 = vmatprep.subr.mxu0 0.0
    %1195 = vmatpush1.msra.mxu0 %v853
    %1196 = vmatprep.subr.mxu0 0.0
    %1197 = vmatpush1.msra.mxu0 %v852
    %1198 = vmatprep.subr.mxu0 0.0
    %1199 = vmatpush1.msra.mxu0 %v851
    %1200 = vmatprep.subr.mxu0 0.0
    %1201 = vmatpush1.msra.mxu0 %v850
    %1202 = vmatprep.subr.mxu0 0.0
    %1203 = vmatpush1.msra.mxu0 %v849
    %1204 = vmatprep.subr.mxu0 0.0
    %1205 = vmatpush1.msra.mxu0 %v848
    %1206 = vmatprep.subr.mxu0 0.0
    %1207 = vmatpush2.msra.mxu0 %v879
    %1208 = vmatprep.subr.mxu0 0.0
    %1209 = vmatpush2.msra.mxu0 %v878
    %1210 = vmatprep.subr.mxu0 0.0
    %1211 = vmatpush2.msra.mxu0 %v877
    %1212 = vmatprep.subr.mxu0 0.0
    %1213 = vmatpush2.msra.mxu0 %v876
    %1214 = vmatprep.subr.mxu0 0.0
    %1215 = vmatpush2.msra.mxu0 %v875
    %1216 = vmatprep.subr.mxu0 0.0
    %1217 = vmatpush2.msra.mxu0 %v874
    %1218 = vmatprep.subr.mxu0 0.0
    %1219 = vmatpush2.msra.mxu0 %v873
    %1220 = vmatprep.subr.mxu0 0.0
    %1221 = vmatpush2.msra.mxu0 %v872
    %1222 = vmatprep.subr.mxu0 0.0
    %1223 = vmatpush2.msra.mxu0 %v871
    %1224 = vmatprep.subr.mxu0 0.0
    %1225 = vmatpush2.msra.mxu0 %v870
    %1226 = vmatprep.subr.mxu0 0.0
    %1227 = vmatpush2.msra.mxu0 %v869
    %1228 = vmatprep.subr.mxu0 0.0
    %1229 = vmatpush2.msra.mxu0 %v868
    %1230 = vmatprep.subr.mxu0 0.0
    %1231 = vmatpush2.msra.mxu0 %v867
    %1232 = vmatprep.subr.mxu0 0.0
    %1233 = vmatpush2.msra.mxu0 %v866
    %1234 = vmatprep.subr.mxu0 0.0
    %1235 = vmatpush2.msra.mxu0 %v865
    %1236 = vmatprep.subr.mxu0 0.0
    %1237 = vmatpush2.msra.mxu0 %v864
    %1238 = vmatprep.mubr.f32.mxu0 %v1091
    %1239 = vmatmul.mubr.f32.gmra.mxu0 %v1090
    %v1240 = vpop.f32.mrf.mxu0
    %v1241 = vadd.f32 %v1171, %v1240
    %v1242 = vpop.f32.mrf.mxu0
    %1243 = vdwg.mxu0
    %1244 = vmatprep.subr.mxu0 0.0
    %1245 = vmatpush1.msra.mxu0 %v895
    %1246 = vmatprep.subr.mxu0 0.0
    %1247 = vmatpush1.msra.mxu0 %v894
    %1248 = vmatprep.subr.mxu0 0.0
    %1249 = vmatpush1.msra.mxu0 %v893
    %1250 = vmatprep.subr.mxu0 0.0
    %1251 = vmatpush1.msra.mxu0 %v892
    %1252 = vmatprep.subr.mxu0 0.0
    %1253 = vmatpush1.msra.mxu0 %v891
    %1254 = vmatprep.subr.mxu0 0.0
    %1255 = vmatpush1.msra.mxu0 %v890
    %1256 = vmatprep.subr.mxu0 0.0
    %1257 = vmatpush1.msra.mxu0 %v889
    %1258 = vmatprep.subr.mxu0 0.0
    %1259 = vmatpush1.msra.mxu0 %v888
    %1260 = vmatprep.subr.mxu0 0.0
    %1261 = vmatpush1.msra.mxu0 %v887
    %1262 = vmatprep.subr.mxu0 0.0
    %1263 = vmatpush1.msra.mxu0 %v886
    %1264 = vmatprep.subr.mxu0 0.0
    %1265 = vmatpush1.msra.mxu0 %v885
    %1266 = vmatprep.subr.mxu0 0.0
    %1267 = vmatpush1.msra.mxu0 %v884
    %1268 = vmatprep.subr.mxu0 0.0
    %1269 = vmatpush1.msra.mxu0 %v883
    %1270 = vmatprep.subr.mxu0 0.0
    %1271 = vmatpush1.msra.mxu0 %v882
    %1272 = vmatprep.subr.mxu0 0.0
    %1273 = vmatpush1.msra.mxu0 %v881
    %1274 = vmatprep.subr.mxu0 0.0
    %1275 = vmatpush1.msra.mxu0 %v880
    %1276 = vmatprep.subr.mxu0 0.0
    %1277 = vmatpush2.msra.mxu0 %v911
    %1278 = vmatprep.subr.mxu0 0.0
    %1279 = vmatpush2.msra.mxu0 %v910
    %1280 = vmatprep.subr.mxu0 0.0
    %1281 = vmatpush2.msra.mxu0 %v909
    %1282 = vmatprep.subr.mxu0 0.0
    %1283 = vmatpush2.msra.mxu0 %v908
    %1284 = vmatprep.subr.mxu0 0.0
    %1285 = vmatpush2.msra.mxu0 %v907
    %1286 = vmatprep.subr.mxu0 0.0
    %1287 = vmatpush2.msra.mxu0 %v906
    %1288 = vmatprep.subr.mxu0 0.0
    %1289 = vmatpush2.msra.mxu0 %v905
    %1290 = vmatprep.subr.mxu0 0.0
    %1291 = vmatpush2.msra.mxu0 %v904
    %1292 = vmatprep.subr.mxu0 0.0
    %1293 = vmatpush2.msra.mxu0 %v903
    %1294 = vmatprep.subr.mxu0 0.0
    %1295 = vmatpush2.msra.mxu0 %v902
    %1296 = vmatprep.subr.mxu0 0.0
    %1297 = vmatpush2.msra.mxu0 %v901
    %1298 = vmatprep.subr.mxu0 0.0
    %1299 = vmatpush2.msra.mxu0 %v900
    %1300 = vmatprep.subr.mxu0 0.0
    %1301 = vmatpush2.msra.mxu0 %v899
    %1302 = vmatprep.subr.mxu0 0.0
    %1303 = vmatpush2.msra.mxu0 %v898
    %1304 = vmatprep.subr.mxu0 0.0
    %1305 = vmatpush2.msra.mxu0 %v897
    %1306 = vmatprep.subr.mxu0 0.0
    %1307 = vmatpush2.msra.mxu0 %v896
    %1308 = vmatprep.mubr.f32.mxu0 %v1093
    %1309 = vmatmul.mubr.f32.gmra.mxu0 %v1092
    %v1310 = vpop.f32.mrf.mxu0
    %v1311 = vadd.f32 %v1241, %v1310
    %v1312 = vpop.f32.mrf.mxu0
    %1313 = vdwg.mxu0
    %1314 = vmatprep.subr.mxu0 0.0
    %1315 = vmatpush1.msra.mxu0 %v927
    %1316 = vmatprep.subr.mxu0 0.0
    %1317 = vmatpush1.msra.mxu0 %v926
    %1318 = vmatprep.subr.mxu0 0.0
    %1319 = vmatpush1.msra.mxu0 %v925
    %1320 = vmatprep.subr.mxu0 0.0
    %1321 = vmatpush1.msra.mxu0 %v924
    %1322 = vmatprep.subr.mxu0 0.0
    %1323 = vmatpush1.msra.mxu0 %v923
    %1324 = vmatprep.subr.mxu0 0.0
    %1325 = vmatpush1.msra.mxu0 %v922
    %1326 = vmatprep.subr.mxu0 0.0
    %1327 = vmatpush1.msra.mxu0 %v921
    %1328 = vmatprep.subr.mxu0 0.0
    %1329 = vmatpush1.msra.mxu0 %v920
    %1330 = vmatprep.subr.mxu0 0.0
    %1331 = vmatpush1.msra.mxu0 %v919
    %1332 = vmatprep.subr.mxu0 0.0
    %1333 = vmatpush1.msra.mxu0 %v918
    %1334 = vmatprep.subr.mxu0 0.0
    %1335 = vmatpush1.msra.mxu0 %v917
    %1336 = vmatprep.subr.mxu0 0.0
    %1337 = vmatpush1.msra.mxu0 %v916
    %1338 = vmatprep.subr.mxu0 0.0
    %1339 = vmatpush1.msra.mxu0 %v915
    %1340 = vmatprep.subr.mxu0 0.0
    %1341 = vmatpush1.msra.mxu0 %v914
    %1342 = vmatprep.subr.mxu0 0.0
    %1343 = vmatpush1.msra.mxu0 %v913
    %1344 = vmatprep.subr.mxu0 0.0
    %1345 = vmatpush1.msra.mxu0 %v912
    %1346 = vmatprep.subr.mxu0 0.0
    %1347 = vmatpush2.msra.mxu0 %v943
    %1348 = vmatprep.subr.mxu0 0.0
    %1349 = vmatpush2.msra.mxu0 %v942
    %1350 = vmatprep.subr.mxu0 0.0
    %1351 = vmatpush2.msra.mxu0 %v941
    %1352 = vmatprep.subr.mxu0 0.0
    %1353 = vmatpush2.msra.mxu0 %v940
    %1354 = vmatprep.subr.mxu0 0.0
    %1355 = vmatpush2.msra.mxu0 %v939
    %1356 = vmatprep.subr.mxu0 0.0
    %1357 = vmatpush2.msra.mxu0 %v938
    %1358 = vmatprep.subr.mxu0 0.0
    %1359 = vmatpush2.msra.mxu0 %v937
    %1360 = vmatprep.subr.mxu0 0.0
    %1361 = vmatpush2.msra.mxu0 %v936
    %1362 = vmatprep.subr.mxu0 0.0
    %1363 = vmatpush2.msra.mxu0 %v935
    %1364 = vmatprep.subr.mxu0 0.0
    %1365 = vmatpush2.msra.mxu0 %v934
    %1366 = vmatprep.subr.mxu0 0.0
    %1367 = vmatpush2.msra.mxu0 %v933
    %1368 = vmatprep.subr.mxu0 0.0
    %1369 = vmatpush2.msra.mxu0 %v932
    %1370 = vmatprep.subr.mxu0 0.0
    %1371 = vmatpush2.msra.mxu0 %v931
    %1372 = vmatprep.subr.mxu0 0.0
    %1373 = vmatpush2.msra.mxu0 %v930
    %1374 = vmatprep.subr.mxu0 0.0
    %1375 = vmatpush2.msra.mxu0 %v929
    %1376 = vmatprep.subr.mxu0 0.0
    %1377 = vmatpush2.msra.mxu0 %v928
    %1378 = vmatprep.mubr.f32.mxu0 %v1095
    %1379 = vmatmul.mubr.f32.gmra.mxu0 %v1094
    %v1380 = vpop.f32.mrf.mxu0
    %v1381 = vadd.f32 %v1311, %v1380
    %v1382 = vpop.f32.mrf.mxu0
    %1383 = vdwg.mxu0
    %1384 = vmatprep.subr.mxu0 0.0
    %1385 = vmatpush1.msra.mxu0 %v959
    %1386 = vmatprep.subr.mxu0 0.0
    %1387 = vmatpush1.msra.mxu0 %v958
    %1388 = vmatprep.subr.mxu0 0.0
    %1389 = vmatpush1.msra.mxu0 %v957
    %1390 = vmatprep.subr.mxu0 0.0
    %1391 = vmatpush1.msra.mxu0 %v956
    %1392 = vmatprep.subr.mxu0 0.0
    %1393 = vmatpush1.msra.mxu0 %v955
    %1394 = vmatprep.subr.mxu0 0.0
    %1395 = vmatpush1.msra.mxu0 %v954
    %1396 = vmatprep.subr.mxu0 0.0
    %1397 = vmatpush1.msra.mxu0 %v953
    %1398 = vmatprep.subr.mxu0 0.0
    %1399 = vmatpush1.msra.mxu0 %v952
    %1400 = vmatprep.subr.mxu0 0.0
    %1401 = vmatpush1.msra.mxu0 %v951
    %1402 = vmatprep.subr.mxu0 0.0
    %1403 = vmatpush1.msra.mxu0 %v950
    %1404 = vmatprep.subr.mxu0 0.0
    %1405 = vmatpush1.msra.mxu0 %v949
    %1406 = vmatprep.subr.mxu0 0.0
    %1407 = vmatpush1.msra.mxu0 %v948
    %1408 = vmatprep.subr.mxu0 0.0
    %1409 = vmatpush1.msra.mxu0 %v947
    %1410 = vmatprep.subr.mxu0 0.0
    %1411 = vmatpush1.msra.mxu0 %v946
    %1412 = vmatprep.subr.mxu0 0.0
    %1413 = vmatpush1.msra.mxu0 %v945
    %1414 = vmatprep.subr.mxu0 0.0
    %1415 = vmatpush1.msra.mxu0 %v944
    %1416 = vmatprep.subr.mxu0 0.0
    %1417 = vmatpush2.msra.mxu0 %v975
    %1418 = vmatprep.subr.mxu0 0.0
    %1419 = vmatpush2.msra.mxu0 %v974
    %1420 = vmatprep.subr.mxu0 0.0
    %1421 = vmatpush2.msra.mxu0 %v973
    %1422 = vmatprep.subr.mxu0 0.0
    %1423 = vmatpush2.msra.mxu0 %v972
    %1424 = vmatprep.subr.mxu0 0.0
    %1425 = vmatpush2.msra.mxu0 %v971
    %1426 = vmatprep.subr.mxu0 0.0
    %1427 = vmatpush2.msra.mxu0 %v970
    %1428 = vmatprep.subr.mxu0 0.0
    %1429 = vmatpush2.msra.mxu0 %v969
    %1430 = vmatprep.subr.mxu0 0.0
    %1431 = vmatpush2.msra.mxu0 %v968
    %1432 = vmatprep.subr.mxu0 0.0
    %1433 = vmatpush2.msra.mxu0 %v967
    %1434 = vmatprep.subr.mxu0 0.0
    %1435 = vmatpush2.msra.mxu0 %v966
    %1436 = vmatprep.subr.mxu0 0.0
    %1437 = vmatpush2.msra.mxu0 %v965
    %1438 = vmatprep.subr.mxu0 0.0
    %1439 = vmatpush2.msra.mxu0 %v964
    %1440 = vmatprep.subr.mxu0 0.0
    %1441 = vmatpush2.msra.mxu0 %v963
    %1442 = vmatprep.subr.mxu0 0.0
    %1443 = vmatpush2.msra.mxu0 %v962
    %1444 = vmatprep.subr.mxu0 0.0
    %1445 = vmatpush2.msra.mxu0 %v961
    %1446 = vmatprep.subr.mxu0 0.0
    %1447 = vmatpush2.msra.mxu0 %v960
    %1448 = vmatprep.mubr.f32.mxu0 %v1097
    %1449 = vmatmul.mubr.f32.gmra.mxu0 %v1096
    %v1450 = vpop.f32.mrf.mxu0
    %v1451 = vadd.f32 %v1381, %v1450
    %v1452 = vpop.f32.mrf.mxu0
    %1453 = vdwg.mxu0
    %1454 = vmatprep.subr.mxu0 0.0
    %1455 = vmatpush1.msra.mxu0 %v991
    %1456 = vmatprep.subr.mxu0 0.0
    %1457 = vmatpush1.msra.mxu0 %v990
    %1458 = vmatprep.subr.mxu0 0.0
    %1459 = vmatpush1.msra.mxu0 %v989
    %1460 = vmatprep.subr.mxu0 0.0
    %1461 = vmatpush1.msra.mxu0 %v988
    %1462 = vmatprep.subr.mxu0 0.0
    %1463 = vmatpush1.msra.mxu0 %v987
    %1464 = vmatprep.subr.mxu0 0.0
    %1465 = vmatpush1.msra.mxu0 %v986
    %1466 = vmatprep.subr.mxu0 0.0
    %1467 = vmatpush1.msra.mxu0 %v985
    %1468 = vmatprep.subr.mxu0 0.0
    %1469 = vmatpush1.msra.mxu0 %v984
    %1470 = vmatprep.subr.mxu0 0.0
    %1471 = vmatpush1.msra.mxu0 %v983
    %1472 = vmatprep.subr.mxu0 0.0
    %1473 = vmatpush1.msra.mxu0 %v982
    %1474 = vmatprep.subr.mxu0 0.0
    %1475 = vmatpush1.msra.mxu0 %v981
    %1476 = vmatprep.subr.mxu0 0.0
    %1477 = vmatpush1.msra.mxu0 %v980
    %1478 = vmatprep.subr.mxu0 0.0
    %1479 = vmatpush1.msra.mxu0 %v979
    %1480 = vmatprep.subr.mxu0 0.0
    %1481 = vmatpush1.msra.mxu0 %v978
    %1482 = vmatprep.subr.mxu0 0.0
    %1483 = vmatpush1.msra.mxu0 %v977
    %1484 = vmatprep.subr.mxu0 0.0
    %1485 = vmatpush1.msra.mxu0 %v976
    %1486 = vmatprep.subr.mxu0 0.0
    %1487 = vmatpush2.msra.mxu0 %v1007
    %1488 = vmatprep.subr.mxu0 0.0
    %1489 = vmatpush2.msra.mxu0 %v1006
    %1490 = vmatprep.subr.mxu0 0.0
    %1491 = vmatpush2.msra.mxu0 %v1005
    %1492 = vmatprep.subr.mxu0 0.0
    %1493 = vmatpush2.msra.mxu0 %v1004
    %1494 = vmatprep.subr.mxu0 0.0
    %1495 = vmatpush2.msra.mxu0 %v1003
    %1496 = vmatprep.subr.mxu0 0.0
    %1497 = vmatpush2.msra.mxu0 %v1002
    %1498 = vmatprep.subr.mxu0 0.0
    %1499 = vmatpush2.msra.mxu0 %v1001
    %1500 = vmatprep.subr.mxu0 0.0
    %1501 = vmatpush2.msra.mxu0 %v1000
    %1502 = vmatprep.subr.mxu0 0.0
    %1503 = vmatpush2.msra.mxu0 %v999
    %1504 = vmatprep.subr.mxu0 0.0
    %1505 = vmatpush2.msra.mxu0 %v998
    %1506 = vmatprep.subr.mxu0 0.0
    %1507 = vmatpush2.msra.mxu0 %v997
    %1508 = vmatprep.subr.mxu0 0.0
    %1509 = vmatpush2.msra.mxu0 %v996
    %1510 = vmatprep.subr.mxu0 0.0
    %1511 = vmatpush2.msra.mxu0 %v995
    %1512 = vmatprep.subr.mxu0 0.0
    %1513 = vmatpush2.msra.mxu0 %v994
    %1514 = vmatprep.subr.mxu0 0.0
    %1515 = vmatpush2.msra.mxu0 %v993
    %1516 = vmatprep.subr.mxu0 0.0
    %1517 = vmatpush2.msra.mxu0 %v992
    %1518 = vmatprep.mubr.f32.mxu0 %v1099
    %1519 = vmatmul.mubr.f32.gmra.mxu0 %v1098
    %v1520 = vpop.f32.mrf.mxu0
    %v1521 = vadd.f32 %v1451, %v1520
    %v1522 = vpop.f32.mrf.mxu0
    %1523 = vdwg.mxu0
    %1524 = vmatprep.subr.mxu0 0.0
    %1525 = vmatpush1.msra.mxu0 %v1023
    %1526 = vmatprep.subr.mxu0 0.0
    %1527 = vmatpush1.msra.mxu0 %v1022
    %1528 = vmatprep.subr.mxu0 0.0
    %1529 = vmatpush1.msra.mxu0 %v1021
    %1530 = vmatprep.subr.mxu0 0.0
    %1531 = vmatpush1.msra.mxu0 %v1020
    %1532 = vmatprep.subr.mxu0 0.0
    %1533 = vmatpush1.msra.mxu0 %v1019
    %1534 = vmatprep.subr.mxu0 0.0
    %1535 = vmatpush1.msra.mxu0 %v1018
    %1536 = vmatprep.subr.mxu0 0.0
    %1537 = vmatpush1.msra.mxu0 %v1017
    %1538 = vmatprep.subr.mxu0 0.0
    %1539 = vmatpush1.msra.mxu0 %v1016
    %1540 = vmatprep.subr.mxu0 0.0
    %1541 = vmatpush1.msra.mxu0 %v1015
    %1542 = vmatprep.subr.mxu0 0.0
    %1543 = vmatpush1.msra.mxu0 %v1014
    %1544 = vmatprep.subr.mxu0 0.0
    %1545 = vmatpush1.msra.mxu0 %v1013
    %1546 = vmatprep.subr.mxu0 0.0
    %1547 = vmatpush1.msra.mxu0 %v1012
    %1548 = vmatprep.subr.mxu0 0.0
    %1549 = vmatpush1.msra.mxu0 %v1011
    %1550 = vmatprep.subr.mxu0 0.0
    %1551 = vmatpush1.msra.mxu0 %v1010
    %1552 = vmatprep.subr.mxu0 0.0
    %1553 = vmatpush1.msra.mxu0 %v1009
    %1554 = vmatprep.subr.mxu0 0.0
    %1555 = vmatpush1.msra.mxu0 %v1008
    %1556 = vmatprep.subr.mxu0 0.0
    %1557 = vmatpush2.msra.mxu0 %v1039
    %1558 = vmatprep.subr.mxu0 0.0
    %1559 = vmatpush2.msra.mxu0 %v1038
    %1560 = vmatprep.subr.mxu0 0.0
    %1561 = vmatpush2.msra.mxu0 %v1037
    %1562 = vmatprep.subr.mxu0 0.0
    %1563 = vmatpush2.msra.mxu0 %v1036
    %1564 = vmatprep.subr.mxu0 0.0
    %1565 = vmatpush2.msra.mxu0 %v1035
    %1566 = vmatprep.subr.mxu0 0.0
    %1567 = vmatpush2.msra.mxu0 %v1034
    %1568 = vmatprep.subr.mxu0 0.0
    %1569 = vmatpush2.msra.mxu0 %v1033
    %1570 = vmatprep.subr.mxu0 0.0
    %1571 = vmatpush2.msra.mxu0 %v1032
    %1572 = vmatprep.subr.mxu0 0.0
    %1573 = vmatpush2.msra.mxu0 %v1031
    %1574 = vmatprep.subr.mxu0 0.0
    %1575 = vmatpush2.msra.mxu0 %v1030
    %1576 = vmatprep.subr.mxu0 0.0
    %1577 = vmatpush2.msra.mxu0 %v1029
    %1578 = vmatprep.subr.mxu0 0.0
    %1579 = vmatpush2.msra.mxu0 %v1028
    %1580 = vmatprep.subr.mxu0 0.0
    %1581 = vmatpush2.msra.mxu0 %v1027
    %1582 = vmatprep.subr.mxu0 0.0
    %1583 = vmatpush2.msra.mxu0 %v1026
    %1584 = vmatprep.subr.mxu0 0.0
    %1585 = vmatpush2.msra.mxu0 %v1025
    %1586 = vmatprep.subr.mxu0 0.0
    %1587 = vmatpush2.msra.mxu0 %v1024
    %1588 = vmatprep.mubr.f32.mxu0 %v1101
    %1589 = vmatmul.mubr.f32.gmra.mxu0 %v1100
    %v1590 = vpop.f32.mrf.mxu0
    %v1591 = vadd.f32 %v1521, %v1590
    %v1592 = vpop.f32.mrf.mxu0
    %1593 = vdwg.mxu0
    %1594 = vmatprep.subr.mxu0 0.0
    %1595 = vmatpush1.msra.mxu0 %v1055
    %1596 = vmatprep.subr.mxu0 0.0
    %1597 = vmatpush1.msra.mxu0 %v1054
    %1598 = vmatprep.subr.mxu0 0.0
    %1599 = vmatpush1.msra.mxu0 %v1053
    %1600 = vmatprep.subr.mxu0 0.0
    %1601 = vmatpush1.msra.mxu0 %v1052
    %1602 = vmatprep.subr.mxu0 0.0
    %1603 = vmatpush1.msra.mxu0 %v1051
    %1604 = vmatprep.subr.mxu0 0.0
    %1605 = vmatpush1.msra.mxu0 %v1050
    %1606 = vmatprep.subr.mxu0 0.0
    %1607 = vmatpush1.msra.mxu0 %v1049
    %1608 = vmatprep.subr.mxu0 0.0
    %1609 = vmatpush1.msra.mxu0 %v1048
    %1610 = vmatprep.subr.mxu0 0.0
    %1611 = vmatpush1.msra.mxu0 %v1047
    %1612 = vmatprep.subr.mxu0 0.0
    %1613 = vmatpush1.msra.mxu0 %v1046
    %1614 = vmatprep.subr.mxu0 0.0
    %1615 = vmatpush1.msra.mxu0 %v1045
    %1616 = vmatprep.subr.mxu0 0.0
    %1617 = vmatpush1.msra.mxu0 %v1044
    %1618 = vmatprep.subr.mxu0 0.0
    %1619 = vmatpush1.msra.mxu0 %v1043
    %1620 = vmatprep.subr.mxu0 0.0
    %1621 = vmatpush1.msra.mxu0 %v1042
    %1622 = vmatprep.subr.mxu0 0.0
    %1623 = vmatpush1.msra.mxu0 %v1041
    %1624 = vmatprep.subr.mxu0 0.0
    %1625 = vmatpush1.msra.mxu0 %v1040
    %1626 = vmatprep.subr.mxu0 0.0
    %1627 = vmatpush2.msra.mxu0 %v1071
    %1628 = vmatprep.subr.mxu0 0.0
    %1629 = vmatpush2.msra.mxu0 %v1070
    %1630 = vmatprep.subr.mxu0 0.0
    %1631 = vmatpush2.msra.mxu0 %v1069
    %1632 = vmatprep.subr.mxu0 0.0
    %1633 = vmatpush2.msra.mxu0 %v1068
    %1634 = vmatprep.subr.mxu0 0.0
    %1635 = vmatpush2.msra.mxu0 %v1067
    %1636 = vmatprep.subr.mxu0 0.0
    %1637 = vmatpush2.msra.mxu0 %v1066
    %1638 = vmatprep.subr.mxu0 0.0
    %1639 = vmatpush2.msra.mxu0 %v1065
    %1640 = vmatprep.subr.mxu0 0.0
    %1641 = vmatpush2.msra.mxu0 %v1064
    %1642 = vmatprep.subr.mxu0 0.0
    %1643 = vmatpush2.msra.mxu0 %v1063
    %1644 = vmatprep.subr.mxu0 0.0
    %1645 = vmatpush2.msra.mxu0 %v1062
    %1646 = vmatprep.subr.mxu0 0.0
    %1647 = vmatpush2.msra.mxu0 %v1061
    %1648 = vmatprep.subr.mxu0 0.0
    %1649 = vmatpush2.msra.mxu0 %v1060
    %1650 = vmatprep.subr.mxu0 0.0
    %1651 = vmatpush2.msra.mxu0 %v1059
    %1652 = vmatprep.subr.mxu0 0.0
    %1653 = vmatpush2.msra.mxu0 %v1058
    %1654 = vmatprep.subr.mxu0 0.0
    %1655 = vmatpush2.msra.mxu0 %v1057
    %1656 = vmatprep.subr.mxu0 0.0
    %1657 = vmatpush2.msra.mxu0 %v1056
    %1658 = vmatprep.mubr.f32.mxu0 %v1103
    %1659 = vmatmul.mubr.f32.gmra.mxu0 %v1102
    %v1660 = vpop.f32.mrf.mxu0
    %v1661 = vadd.f32 %v1591, %v1660
    %v1662 = vpop.f32.mrf.mxu0
    %1663 = vdwg.mxu0
    %1664 = vmatprep.subr.mxu0 0.0
    %1665 = vmatpush1.msra.mxu0 %v319
    %1666 = vmatprep.subr.mxu0 0.0
    %1667 = vmatpush1.msra.mxu0 %v318
    %1668 = vmatprep.subr.mxu0 0.0
    %1669 = vmatpush1.msra.mxu0 %v317
    %1670 = vmatprep.subr.mxu0 0.0
    %1671 = vmatpush1.msra.mxu0 %v316
    %1672 = vmatprep.subr.mxu0 0.0
    %1673 = vmatpush1.msra.mxu0 %v315
    %1674 = vmatprep.subr.mxu0 0.0
    %1675 = vmatpush1.msra.mxu0 %v314
    %1676 = vmatprep.subr.mxu0 0.0
    %1677 = vmatpush1.msra.mxu0 %v313
    %1678 = vmatprep.subr.mxu0 0.0
    %1679 = vmatpush1.msra.mxu0 %v312
    %1680 = vmatprep.subr.mxu0 0.0
    %1681 = vmatpush1.msra.mxu0 %v311
    %1682 = vmatprep.subr.mxu0 0.0
    %1683 = vmatpush1.msra.mxu0 %v310
    %1684 = vmatprep.subr.mxu0 0.0
    %1685 = vmatpush1.msra.mxu0 %v309
    %1686 = vmatprep.subr.mxu0 0.0
    %1687 = vmatpush1.msra.mxu0 %v308
    %1688 = vmatprep.subr.mxu0 0.0
    %1689 = vmatpush1.msra.mxu0 %v307
    %1690 = vmatprep.subr.mxu0 0.0
    %1691 = vmatpush1.msra.mxu0 %v306
    %1692 = vmatprep.subr.mxu0 0.0
    %1693 = vmatpush1.msra.mxu0 %v305
    %1694 = vmatprep.subr.mxu0 0.0
    %1695 = vmatpush1.msra.mxu0 %v304
    %1696 = vmatprep.subr.mxu0 0.0
    %1697 = vmatpush2.msra.mxu0 %v335
    %1698 = vmatprep.subr.mxu0 0.0
    %1699 = vmatpush2.msra.mxu0 %v334
    %1700 = vmatprep.subr.mxu0 0.0
    %1701 = vmatpush2.msra.mxu0 %v333
    %1702 = vmatprep.subr.mxu0 0.0
    %1703 = vmatpush2.msra.mxu0 %v332
    %1704 = vmatprep.subr.mxu0 0.0
    %1705 = vmatpush2.msra.mxu0 %v331
    %1706 = vmatprep.subr.mxu0 0.0
    %1707 = vmatpush2.msra.mxu0 %v330
    %1708 = vmatprep.subr.mxu0 0.0
    %1709 = vmatpush2.msra.mxu0 %v329
    %1710 = vmatprep.subr.mxu0 0.0
    %1711 = vmatpush2.msra.mxu0 %v328
    %1712 = vmatprep.subr.mxu0 0.0
    %1713 = vmatpush2.msra.mxu0 %v327
    %1714 = vmatprep.subr.mxu0 0.0
    %1715 = vmatpush2.msra.mxu0 %v326
    %1716 = vmatprep.subr.mxu0 0.0
    %1717 = vmatpush2.msra.mxu0 %v325
    %1718 = vmatprep.subr.mxu0 0.0
    %1719 = vmatpush2.msra.mxu0 %v324
    %1720 = vmatprep.subr.mxu0 0.0
    %1721 = vmatpush2.msra.mxu0 %v323
    %1722 = vmatprep.subr.mxu0 0.0
    %1723 = vmatpush2.msra.mxu0 %v322
    %1724 = vmatprep.subr.mxu0 0.0
    %1725 = vmatpush2.msra.mxu0 %v321
    %1726 = vmatprep.subr.mxu0 0.0
    %1727 = vmatpush2.msra.mxu0 %v320
    %1728 = vmatprep.mubr.f32.mxu0 %v1073
    %1729 = vmatmul.mubr.f32.gmra.mxu0 %v1072
    %v1730 = vpop.f32.mrf.mxu0
    %v1731 = vadd.f32 %v1661, %v1730
    %v1732 = vpop.f32.mrf.mxu0
    %1733 = vdwg.mxu0
    %1734 = vmatprep.subr.mxu0 0.0
    %1735 = vmatpush1.msra.mxu0 %v351
    %1736 = vmatprep.subr.mxu0 0.0
    %1737 = vmatpush1.msra.mxu0 %v350
    %1738 = vmatprep.subr.mxu0 0.0
    %1739 = vmatpush1.msra.mxu0 %v349
    %1740 = vmatprep.subr.mxu0 0.0
    %1741 = vmatpush1.msra.mxu0 %v348
    %1742 = vmatprep.subr.mxu0 0.0
    %1743 = vmatpush1.msra.mxu0 %v347
    %1744 = vmatprep.subr.mxu0 0.0
    %1745 = vmatpush1.msra.mxu0 %v346
    %1746 = vmatprep.subr.mxu0 0.0
    %1747 = vmatpush1.msra.mxu0 %v345
    %1748 = vmatprep.subr.mxu0 0.0
    %1749 = vmatpush1.msra.mxu0 %v344
    %1750 = vmatprep.subr.mxu0 0.0
    %1751 = vmatpush1.msra.mxu0 %v343
    %1752 = vmatprep.subr.mxu0 0.0
    %1753 = vmatpush1.msra.mxu0 %v342
    %1754 = vmatprep.subr.mxu0 0.0
    %1755 = vmatpush1.msra.mxu0 %v341
    %1756 = vmatprep.subr.mxu0 0.0
    %1757 = vmatpush1.msra.mxu0 %v340
    %1758 = vmatprep.subr.mxu0 0.0
    %1759 = vmatpush1.msra.mxu0 %v339
    %1760 = vmatprep.subr.mxu0 0.0
    %1761 = vmatpush1.msra.mxu0 %v338
    %1762 = vmatprep.subr.mxu0 0.0
    %1763 = vmatpush1.msra.mxu0 %v337
    %1764 = vmatprep.subr.mxu0 0.0
    %1765 = vmatpush1.msra.mxu0 %v336
    %1766 = vmatprep.subr.mxu0 0.0
    %1767 = vmatpush2.msra.mxu0 %v367
    %1768 = vmatprep.subr.mxu0 0.0
    %1769 = vmatpush2.msra.mxu0 %v366
    %1770 = vmatprep.subr.mxu0 0.0
    %1771 = vmatpush2.msra.mxu0 %v365
    %1772 = vmatprep.subr.mxu0 0.0
    %1773 = vmatpush2.msra.mxu0 %v364
    %1774 = vmatprep.subr.mxu0 0.0
    %1775 = vmatpush2.msra.mxu0 %v363
    %1776 = vmatprep.subr.mxu0 0.0
    %1777 = vmatpush2.msra.mxu0 %v362
    %1778 = vmatprep.subr.mxu0 0.0
    %1779 = vmatpush2.msra.mxu0 %v361
    %1780 = vmatprep.subr.mxu0 0.0
    %1781 = vmatpush2.msra.mxu0 %v360
    %1782 = vmatprep.subr.mxu0 0.0
    %1783 = vmatpush2.msra.mxu0 %v359
    %1784 = vmatprep.subr.mxu0 0.0
    %1785 = vmatpush2.msra.mxu0 %v358
    %1786 = vmatprep.subr.mxu0 0.0
    %1787 = vmatpush2.msra.mxu0 %v357
    %1788 = vmatprep.subr.mxu0 0.0
    %1789 = vmatpush2.msra.mxu0 %v356
    %1790 = vmatprep.subr.mxu0 0.0
    %1791 = vmatpush2.msra.mxu0 %v355
    %1792 = vmatprep.subr.mxu0 0.0
    %1793 = vmatpush2.msra.mxu0 %v354
    %1794 = vmatprep.subr.mxu0 0.0
    %1795 = vmatpush2.msra.mxu0 %v353
    %1796 = vmatprep.subr.mxu0 0.0
    %1797 = vmatpush2.msra.mxu0 %v352
    %1798 = vmatprep.mubr.f32.mxu0 %v1075
    %1799 = vmatmul.mubr.f32.gmra.mxu0 %v1074
    %v1800 = vpop.f32.mrf.mxu0
    %v1801 = vadd.f32 %v1731, %v1800
    %v1802 = vpop.f32.mrf.mxu0
    %1803 = vdwg.mxu0
    %1804 = vmatprep.subr.mxu0 0.0
    %1805 = vmatpush1.msra.mxu0 %v383
    %1806 = vmatprep.subr.mxu0 0.0
    %1807 = vmatpush1.msra.mxu0 %v382
    %1808 = vmatprep.subr.mxu0 0.0
    %1809 = vmatpush1.msra.mxu0 %v381
    %1810 = vmatprep.subr.mxu0 0.0
    %1811 = vmatpush1.msra.mxu0 %v380
    %1812 = vmatprep.subr.mxu0 0.0
    %1813 = vmatpush1.msra.mxu0 %v379
    %1814 = vmatprep.subr.mxu0 0.0
    %1815 = vmatpush1.msra.mxu0 %v378
    %1816 = vmatprep.subr.mxu0 0.0
    %1817 = vmatpush1.msra.mxu0 %v377
    %1818 = vmatprep.subr.mxu0 0.0
    %1819 = vmatpush1.msra.mxu0 %v376
    %1820 = vmatprep.subr.mxu0 0.0
    %1821 = vmatpush1.msra.mxu0 %v375
    %1822 = vmatprep.subr.mxu0 0.0
    %1823 = vmatpush1.msra.mxu0 %v374
    %1824 = vmatprep.subr.mxu0 0.0
    %1825 = vmatpush1.msra.mxu0 %v373
    %1826 = vmatprep.subr.mxu0 0.0
    %1827 = vmatpush1.msra.mxu0 %v372
    %1828 = vmatprep.subr.mxu0 0.0
    %1829 = vmatpush1.msra.mxu0 %v371
    %1830 = vmatprep.subr.mxu0 0.0
    %1831 = vmatpush1.msra.mxu0 %v370
    %1832 = vmatprep.subr.mxu0 0.0
    %1833 = vmatpush1.msra.mxu0 %v369
    %1834 = vmatprep.subr.mxu0 0.0
    %1835 = vmatpush1.msra.mxu0 %v368
    %1836 = vmatprep.subr.mxu0 0.0
    %1837 = vmatpush2.msra.mxu0 %v399
    %1838 = vmatprep.subr.mxu0 0.0
    %1839 = vmatpush2.msra.mxu0 %v398
    %1840 = vmatprep.subr.mxu0 0.0
    %1841 = vmatpush2.msra.mxu0 %v397
    %1842 = vmatprep.subr.mxu0 0.0
    %1843 = vmatpush2.msra.mxu0 %v396
    %1844 = vmatprep.subr.mxu0 0.0
    %1845 = vmatpush2.msra.mxu0 %v395
    %1846 = vmatprep.subr.mxu0 0.0
    %1847 = vmatpush2.msra.mxu0 %v394
    %1848 = vmatprep.subr.mxu0 0.0
    %1849 = vmatpush2.msra.mxu0 %v393
    %1850 = vmatprep.subr.mxu0 0.0
    %1851 = vmatpush2.msra.mxu0 %v392
    %1852 = vmatprep.subr.mxu0 0.0
    %1853 = vmatpush2.msra.mxu0 %v391
    %1854 = vmatprep.subr.mxu0 0.0
    %1855 = vmatpush2.msra.mxu0 %v390
    %1856 = vmatprep.subr.mxu0 0.0
    %1857 = vmatpush2.msra.mxu0 %v389
    %1858 = vmatprep.subr.mxu0 0.0
    %1859 = vmatpush2.msra.mxu0 %v388
    %1860 = vmatprep.subr.mxu0 0.0
    %1861 = vmatpush2.msra.mxu0 %v387
    %1862 = vmatprep.subr.mxu0 0.0
    %1863 = vmatpush2.msra.mxu0 %v386
    %1864 = vmatprep.subr.mxu0 0.0
    %1865 = vmatpush2.msra.mxu0 %v385
    %1866 = vmatprep.subr.mxu0 0.0
    %1867 = vmatpush2.msra.mxu0 %v384
    %1868 = vmatprep.mubr.f32.mxu0 %v1077
    %1869 = vmatmul.mubr.f32.gmra.mxu0 %v1076
    %v1870 = vpop.f32.mrf.mxu0
    %v1871 = vadd.f32 %v1801, %v1870
    %v1872 = vpop.f32.mrf.mxu0
    %1873 = vdwg.mxu0
    %1874 = vmatprep.subr.mxu0 0.0
    %1875 = vmatpush1.msra.mxu0 %v415
    %1876 = vmatprep.subr.mxu0 0.0
    %1877 = vmatpush1.msra.mxu0 %v414
    %1878 = vmatprep.subr.mxu0 0.0
    %1879 = vmatpush1.msra.mxu0 %v413
    %1880 = vmatprep.subr.mxu0 0.0
    %1881 = vmatpush1.msra.mxu0 %v412
    %1882 = vmatprep.subr.mxu0 0.0
    %1883 = vmatpush1.msra.mxu0 %v411
    %1884 = vmatprep.subr.mxu0 0.0
    %1885 = vmatpush1.msra.mxu0 %v410
    %1886 = vmatprep.subr.mxu0 0.0
    %1887 = vmatpush1.msra.mxu0 %v409
    %1888 = vmatprep.subr.mxu0 0.0
    %1889 = vmatpush1.msra.mxu0 %v408
    %1890 = vmatprep.subr.mxu0 0.0
    %1891 = vmatpush1.msra.mxu0 %v407
    %1892 = vmatprep.subr.mxu0 0.0
    %1893 = vmatpush1.msra.mxu0 %v406
    %1894 = vmatprep.subr.mxu0 0.0
    %1895 = vmatpush1.msra.mxu0 %v405
    %1896 = vmatprep.subr.mxu0 0.0
    %1897 = vmatpush1.msra.mxu0 %v404
    %1898 = vmatprep.subr.mxu0 0.0
    %1899 = vmatpush1.msra.mxu0 %v403
    %1900 = vmatprep.subr.mxu0 0.0
    %1901 = vmatpush1.msra.mxu0 %v402
    %1902 = vmatprep.subr.mxu0 0.0
    %1903 = vmatpush1.msra.mxu0 %v401
    %1904 = vmatprep.subr.mxu0 0.0
    %1905 = vmatpush1.msra.mxu0 %v400
    %1906 = vmatprep.subr.mxu0 0.0
    %1907 = vmatpush2.msra.mxu0 %v431
    %1908 = vmatprep.subr.mxu0 0.0
    %1909 = vmatpush2.msra.mxu0 %v430
    %1910 = vmatprep.subr.mxu0 0.0
    %1911 = vmatpush2.msra.mxu0 %v429
    %1912 = vmatprep.subr.mxu0 0.0
    %1913 = vmatpush2.msra.mxu0 %v428
    %1914 = vmatprep.subr.mxu0 0.0
    %1915 = vmatpush2.msra.mxu0 %v427
    %1916 = vmatprep.subr.mxu0 0.0
    %1917 = vmatpush2.msra.mxu0 %v426
    %1918 = vmatprep.subr.mxu0 0.0
    %1919 = vmatpush2.msra.mxu0 %v425
    %1920 = vmatprep.subr.mxu0 0.0
    %1921 = vmatpush2.msra.mxu0 %v424
    %1922 = vmatprep.subr.mxu0 0.0
    %1923 = vmatpush2.msra.mxu0 %v423
    %1924 = vmatprep.subr.mxu0 0.0
    %1925 = vmatpush2.msra.mxu0 %v422
    %1926 = vmatprep.subr.mxu0 0.0
    %1927 = vmatpush2.msra.mxu0 %v421
    %1928 = vmatprep.subr.mxu0 0.0
    %1929 = vmatpush2.msra.mxu0 %v420
    %1930 = vmatprep.subr.mxu0 0.0
    %1931 = vmatpush2.msra.mxu0 %v419
    %1932 = vmatprep.subr.mxu0 0.0
    %1933 = vmatpush2.msra.mxu0 %v418
    %1934 = vmatprep.subr.mxu0 0.0
    %1935 = vmatpush2.msra.mxu0 %v417
    %1936 = vmatprep.subr.mxu0 0.0
    %1937 = vmatpush2.msra.mxu0 %v416
    %1938 = vmatprep.mubr.f32.mxu0 %v1079
    %1939 = vmatmul.mubr.f32.gmra.mxu0 %v1078
    %v1940 = vpop.f32.mrf.mxu0
    %v1941 = vadd.f32 %v1871, %v1940
    %v1942 = vpop.f32.mrf.mxu0
    %1943 = vdwg.mxu0
    %1944 = vmatprep.subr.mxu0 0.0
    %1945 = vmatpush1.msra.mxu0 %v447
    %1946 = vmatprep.subr.mxu0 0.0
    %1947 = vmatpush1.msra.mxu0 %v446
    %1948 = vmatprep.subr.mxu0 0.0
    %1949 = vmatpush1.msra.mxu0 %v445
    %1950 = vmatprep.subr.mxu0 0.0
    %1951 = vmatpush1.msra.mxu0 %v444
    %1952 = vmatprep.subr.mxu0 0.0
    %1953 = vmatpush1.msra.mxu0 %v443
    %1954 = vmatprep.subr.mxu0 0.0
    %1955 = vmatpush1.msra.mxu0 %v442
    %1956 = vmatprep.subr.mxu0 0.0
    %1957 = vmatpush1.msra.mxu0 %v441
    %1958 = vmatprep.subr.mxu0 0.0
    %1959 = vmatpush1.msra.mxu0 %v440
    %1960 = vmatprep.subr.mxu0 0.0
    %1961 = vmatpush1.msra.mxu0 %v439
    %1962 = vmatprep.subr.mxu0 0.0
    %1963 = vmatpush1.msra.mxu0 %v438
    %1964 = vmatprep.subr.mxu0 0.0
    %1965 = vmatpush1.msra.mxu0 %v437
    %1966 = vmatprep.subr.mxu0 0.0
    %1967 = vmatpush1.msra.mxu0 %v436
    %1968 = vmatprep.subr.mxu0 0.0
    %1969 = vmatpush1.msra.mxu0 %v435
    %1970 = vmatprep.subr.mxu0 0.0
    %1971 = vmatpush1.msra.mxu0 %v434
    %1972 = vmatprep.subr.mxu0 0.0
    %1973 = vmatpush1.msra.mxu0 %v433
    %1974 = vmatprep.subr.mxu0 0.0
    %1975 = vmatpush1.msra.mxu0 %v432
    %1976 = vmatprep.subr.mxu0 0.0
    %1977 = vmatpush2.msra.mxu0 %v463
    %1978 = vmatprep.subr.mxu0 0.0
    %1979 = vmatpush2.msra.mxu0 %v462
    %1980 = vmatprep.subr.mxu0 0.0
    %1981 = vmatpush2.msra.mxu0 %v461
    %1982 = vmatprep.subr.mxu0 0.0
    %1983 = vmatpush2.msra.mxu0 %v460
    %1984 = vmatprep.subr.mxu0 0.0
    %1985 = vmatpush2.msra.mxu0 %v459
    %1986 = vmatprep.subr.mxu0 0.0
    %1987 = vmatpush2.msra.mxu0 %v458
    %1988 = vmatprep.subr.mxu0 0.0
    %1989 = vmatpush2.msra.mxu0 %v457
    %1990 = vmatprep.subr.mxu0 0.0
    %1991 = vmatpush2.msra.mxu0 %v456
    %1992 = vmatprep.subr.mxu0 0.0
    %1993 = vmatpush2.msra.mxu0 %v455
    %1994 = vmatprep.subr.mxu0 0.0
    %1995 = vmatpush2.msra.mxu0 %v454
    %1996 = vmatprep.subr.mxu0 0.0
    %1997 = vmatpush2.msra.mxu0 %v453
    %1998 = vmatprep.subr.mxu0 0.0
    %1999 = vmatpush2.msra.mxu0 %v452
    %2000 = vmatprep.subr.mxu0 0.0
    %2001 = vmatpush2.msra.mxu0 %v451
    %2002 = vmatprep.subr.mxu0 0.0
    %2003 = vmatpush2.msra.mxu0 %v450
    %2004 = vmatprep.subr.mxu0 0.0
    %2005 = vmatpush2.msra.mxu0 %v449
    %2006 = vmatprep.subr.mxu0 0.0
    %2007 = vmatpush2.msra.mxu0 %v448
    %2008 = vmatprep.mubr.f32.mxu0 %v1081
    %2009 = vmatmul.mubr.f32.gmra.mxu0 %v1080
    %v2010 = vpop.f32.mrf.mxu0
    %v2011 = vadd.f32 %v1941, %v2010
    %v2012 = vpop.f32.mrf.mxu0
    %2013 = vdwg.mxu0
    %2014 = vmatprep.subr.mxu0 0.0
    %2015 = vmatpush1.msra.mxu0 %v479
    %2016 = vmatprep.subr.mxu0 0.0
    %2017 = vmatpush1.msra.mxu0 %v478
    %2018 = vmatprep.subr.mxu0 0.0
    %2019 = vmatpush1.msra.mxu0 %v477
    %2020 = vmatprep.subr.mxu0 0.0
    %2021 = vmatpush1.msra.mxu0 %v476
    %2022 = vmatprep.subr.mxu0 0.0
    %2023 = vmatpush1.msra.mxu0 %v475
    %2024 = vmatprep.subr.mxu0 0.0
    %2025 = vmatpush1.msra.mxu0 %v474
    %2026 = vmatprep.subr.mxu0 0.0
    %2027 = vmatpush1.msra.mxu0 %v473
    %2028 = vmatprep.subr.mxu0 0.0
    %2029 = vmatpush1.msra.mxu0 %v472
    %2030 = vmatprep.subr.mxu0 0.0
    %2031 = vmatpush1.msra.mxu0 %v471
    %2032 = vmatprep.subr.mxu0 0.0
    %2033 = vmatpush1.msra.mxu0 %v470
    %2034 = vmatprep.subr.mxu0 0.0
    %2035 = vmatpush1.msra.mxu0 %v469
    %2036 = vmatprep.subr.mxu0 0.0
    %2037 = vmatpush1.msra.mxu0 %v468
    %2038 = vmatprep.subr.mxu0 0.0
    %2039 = vmatpush1.msra.mxu0 %v467
    %2040 = vmatprep.subr.mxu0 0.0
    %2041 = vmatpush1.msra.mxu0 %v466
    %2042 = vmatprep.subr.mxu0 0.0
    %2043 = vmatpush1.msra.mxu0 %v465
    %2044 = vmatprep.subr.mxu0 0.0
    %2045 = vmatpush1.msra.mxu0 %v464
    %2046 = vmatprep.subr.mxu0 0.0
    %2047 = vmatpush2.msra.mxu0 %v495
    %2048 = vmatprep.subr.mxu0 0.0
    %2049 = vmatpush2.msra.mxu0 %v494
    %2050 = vmatprep.subr.mxu0 0.0
    %2051 = vmatpush2.msra.mxu0 %v493
    %2052 = vmatprep.subr.mxu0 0.0
    %2053 = vmatpush2.msra.mxu0 %v492
    %2054 = vmatprep.subr.mxu0 0.0
    %2055 = vmatpush2.msra.mxu0 %v491
    %2056 = vmatprep.subr.mxu0 0.0
    %2057 = vmatpush2.msra.mxu0 %v490
    %2058 = vmatprep.subr.mxu0 0.0
    %2059 = vmatpush2.msra.mxu0 %v489
    %2060 = vmatprep.subr.mxu0 0.0
    %2061 = vmatpush2.msra.mxu0 %v488
    %2062 = vmatprep.subr.mxu0 0.0
    %2063 = vmatpush2.msra.mxu0 %v487
    %2064 = vmatprep.subr.mxu0 0.0
    %2065 = vmatpush2.msra.mxu0 %v486
    %2066 = vmatprep.subr.mxu0 0.0
    %2067 = vmatpush2.msra.mxu0 %v485
    %2068 = vmatprep.subr.mxu0 0.0
    %2069 = vmatpush2.msra.mxu0 %v484
    %2070 = vmatprep.subr.mxu0 0.0
    %2071 = vmatpush2.msra.mxu0 %v483
    %2072 = vmatprep.subr.mxu0 0.0
    %2073 = vmatpush2.msra.mxu0 %v482
    %2074 = vmatprep.subr.mxu0 0.0
    %2075 = vmatpush2.msra.mxu0 %v481
    %2076 = vmatprep.subr.mxu0 0.0
    %2077 = vmatpush2.msra.mxu0 %v480
    %2078 = vmatprep.mubr.f32.mxu0 %v1083
    %2079 = vmatmul.mubr.f32.gmra.mxu0 %v1082
    %v2080 = vpop.f32.mrf.mxu0
    %v2081 = vadd.f32 %v2011, %v2080
    %v2082 = vpop.f32.mrf.mxu0
    %2083 = vdwg.mxu0
    %2084 = vmatprep.subr.mxu0 0.0
    %2085 = vmatpush1.msra.mxu0 %v511
    %2086 = vmatprep.subr.mxu0 0.0
    %2087 = vmatpush1.msra.mxu0 %v510
    %2088 = vmatprep.subr.mxu0 0.0
    %2089 = vmatpush1.msra.mxu0 %v509
    %2090 = vmatprep.subr.mxu0 0.0
    %2091 = vmatpush1.msra.mxu0 %v508
    %2092 = vmatprep.subr.mxu0 0.0
    %2093 = vmatpush1.msra.mxu0 %v507
    %2094 = vmatprep.subr.mxu0 0.0
    %2095 = vmatpush1.msra.mxu0 %v506
    %2096 = vmatprep.subr.mxu0 0.0
    %2097 = vmatpush1.msra.mxu0 %v505
    %2098 = vmatprep.subr.mxu0 0.0
    %2099 = vmatpush1.msra.mxu0 %v504
    %2100 = vmatprep.subr.mxu0 0.0
    %2101 = vmatpush1.msra.mxu0 %v503
    %2102 = vmatprep.subr.mxu0 0.0
    %2103 = vmatpush1.msra.mxu0 %v502
    %2104 = vmatprep.subr.mxu0 0.0
    %2105 = vmatpush1.msra.mxu0 %v501
    %2106 = vmatprep.subr.mxu0 0.0
    %2107 = vmatpush1.msra.mxu0 %v500
    %2108 = vmatprep.subr.mxu0 0.0
    %2109 = vmatpush1.msra.mxu0 %v499
    %2110 = vmatprep.subr.mxu0 0.0
    %2111 = vmatpush1.msra.mxu0 %v498
    %2112 = vmatprep.subr.mxu0 0.0
    %2113 = vmatpush1.msra.mxu0 %v497
    %2114 = vmatprep.subr.mxu0 0.0
    %2115 = vmatpush1.msra.mxu0 %v496
    %2116 = vmatprep.subr.mxu0 0.0
    %2117 = vmatpush2.msra.mxu0 %v527
    %2118 = vmatprep.subr.mxu0 0.0
    %2119 = vmatpush2.msra.mxu0 %v526
    %2120 = vmatprep.subr.mxu0 0.0
    %2121 = vmatpush2.msra.mxu0 %v525
    %2122 = vmatprep.subr.mxu0 0.0
    %2123 = vmatpush2.msra.mxu0 %v524
    %2124 = vmatprep.subr.mxu0 0.0
    %2125 = vmatpush2.msra.mxu0 %v523
    %2126 = vmatprep.subr.mxu0 0.0
    %2127 = vmatpush2.msra.mxu0 %v522
    %2128 = vmatprep.subr.mxu0 0.0
    %2129 = vmatpush2.msra.mxu0 %v521
    %2130 = vmatprep.subr.mxu0 0.0
    %2131 = vmatpush2.msra.mxu0 %v520
    %2132 = vmatprep.subr.mxu0 0.0
    %2133 = vmatpush2.msra.mxu0 %v519
    %2134 = vmatprep.subr.mxu0 0.0
    %2135 = vmatpush2.msra.mxu0 %v518
    %2136 = vmatprep.subr.mxu0 0.0
    %2137 = vmatpush2.msra.mxu0 %v517
    %2138 = vmatprep.subr.mxu0 0.0
    %2139 = vmatpush2.msra.mxu0 %v516
    %2140 = vmatprep.subr.mxu0 0.0
    %2141 = vmatpush2.msra.mxu0 %v515
    %2142 = vmatprep.subr.mxu0 0.0
    %2143 = vmatpush2.msra.mxu0 %v514
    %2144 = vmatprep.subr.mxu0 0.0
    %2145 = vmatpush2.msra.mxu0 %v513
    %2146 = vmatprep.subr.mxu0 0.0
    %2147 = vmatpush2.msra.mxu0 %v512
    %2148 = vmatprep.mubr.f32.mxu0 %v1085
    %2149 = vmatmul.mubr.f32.gmra.mxu0 %v1084
    %v2150 = vpop.f32.mrf.mxu0
    %v2151 = vadd.f32 %v2081, %v2150
    %v2152 = vpop.f32.mrf.mxu0
    %2153 = vdwg.mxu0
    %2154 = vmatprep.subr.mxu0 0.0
    %2155 = vmatpush1.msra.mxu0 %v543
    %2156 = vmatprep.subr.mxu0 0.0
    %2157 = vmatpush1.msra.mxu0 %v542
    %2158 = vmatprep.subr.mxu0 0.0
    %2159 = vmatpush1.msra.mxu0 %v541
    %2160 = vmatprep.subr.mxu0 0.0
    %2161 = vmatpush1.msra.mxu0 %v540
    %2162 = vmatprep.subr.mxu0 0.0
    %2163 = vmatpush1.msra.mxu0 %v539
    %2164 = vmatprep.subr.mxu0 0.0
    %2165 = vmatpush1.msra.mxu0 %v538
    %2166 = vmatprep.subr.mxu0 0.0
    %2167 = vmatpush1.msra.mxu0 %v537
    %2168 = vmatprep.subr.mxu0 0.0
    %2169 = vmatpush1.msra.mxu0 %v536
    %2170 = vmatprep.subr.mxu0 0.0
    %2171 = vmatpush1.msra.mxu0 %v535
    %2172 = vmatprep.subr.mxu0 0.0
    %2173 = vmatpush1.msra.mxu0 %v534
    %2174 = vmatprep.subr.mxu0 0.0
    %2175 = vmatpush1.msra.mxu0 %v533
    %2176 = vmatprep.subr.mxu0 0.0
    %2177 = vmatpush1.msra.mxu0 %v532
    %2178 = vmatprep.subr.mxu0 0.0
    %2179 = vmatpush1.msra.mxu0 %v531
    %2180 = vmatprep.subr.mxu0 0.0
    %2181 = vmatpush1.msra.mxu0 %v530
    %2182 = vmatprep.subr.mxu0 0.0
    %2183 = vmatpush1.msra.mxu0 %v529
    %2184 = vmatprep.subr.mxu0 0.0
    %2185 = vmatpush1.msra.mxu0 %v528
    %2186 = vmatprep.subr.mxu0 0.0
    %2187 = vmatpush2.msra.mxu0 %v559
    %2188 = vmatprep.subr.mxu0 0.0
    %2189 = vmatpush2.msra.mxu0 %v558
    %2190 = vmatprep.subr.mxu0 0.0
    %2191 = vmatpush2.msra.mxu0 %v557
    %2192 = vmatprep.subr.mxu0 0.0
    %2193 = vmatpush2.msra.mxu0 %v556
    %2194 = vmatprep.subr.mxu0 0.0
    %2195 = vmatpush2.msra.mxu0 %v555
    %2196 = vmatprep.subr.mxu0 0.0
    %2197 = vmatpush2.msra.mxu0 %v554
    %2198 = vmatprep.subr.mxu0 0.0
    %2199 = vmatpush2.msra.mxu0 %v553
    %2200 = vmatprep.subr.mxu0 0.0
    %2201 = vmatpush2.msra.mxu0 %v552
    %2202 = vmatprep.subr.mxu0 0.0
    %2203 = vmatpush2.msra.mxu0 %v551
    %2204 = vmatprep.subr.mxu0 0.0
    %2205 = vmatpush2.msra.mxu0 %v550
    %2206 = vmatprep.subr.mxu0 0.0
    %2207 = vmatpush2.msra.mxu0 %v549
    %2208 = vmatprep.subr.mxu0 0.0
    %2209 = vmatpush2.msra.mxu0 %v548
    %2210 = vmatprep.subr.mxu0 0.0
    %2211 = vmatpush2.msra.mxu0 %v547
    %2212 = vmatprep.subr.mxu0 0.0
    %2213 = vmatpush2.msra.mxu0 %v546
    %2214 = vmatprep.subr.mxu0 0.0
    %2215 = vmatpush2.msra.mxu0 %v545
    %2216 = vmatprep.subr.mxu0 0.0
    %2217 = vmatpush2.msra.mxu0 %v544
    %2218 = vmatprep.mubr.f32.mxu0 %v1087
    %2219 = vmatmul.mubr.f32.gmra.mxu0 %v1086
    %v2220 = vpop.f32.mrf.mxu0
    %v2221 = vadd.f32 %v2151, %v2220
    %v2222 = vpop.f32.mrf.mxu0
    %2223 = vdwg.mxu0
    %v2224 = vld [vmem:[%s4] sm:$0x1]
    %v2226 = vlaneseq
    %v2227 = vshrl.u32 %v2226, 7
    %v2228 = vsub.s32 0, %v2227
    %v2229 = vrot.slane %v2224, %v2228
    %v2231 = vadd.f32 %v2221, %v2229
    %2232 = vst [vmem:[%s5] sm:$0xff] %v2231
    // Predicated region
    $region30: #{model_forward.1} parent=1 // pred_check
      _
    $region31: #{model_forward.1} parent=1 // pred_check_branch
      %2234 = sbr.rel (0) target = $region33
    $region32: #{model_forward.1} parent=1 // pred_region
      _
    $region33: #{model_forward.1} parent=1 // pred_fallthru
      _
    // Predicated region
    $region34: #{model_forward.1} parent=1 // pred_check
      _
    $region35: #{model_forward.1} parent=1 // pred_check_branch
      %2236 = sbr.rel (0) target = $region37
    $region36: #{model_forward.1} parent=1 // pred_region
      _
    $region37: #{model_forward.1} parent=1 // pred_fallthru
      _
    %2237 = vsyncpa [#allocation3], 1
    %2238 = vsyncpa [#allocation5], 1

</llo_original>
